<compile_context>
chip_gen: v7x
topology: tpu7x:2x2x1
jax: 0.10.0
libtpu: 0.0.40
codegen_flags: <defaults>
</compile_context>

<pallas_src>
import functools

import jax
import jax.numpy as jnp
from jax.experimental import pallas as pl
from jax.experimental.pallas import tpu as pltpu

HISTORY_DIM = 30
PREDICTION_DIM = 30
LATENT_DIM = 10
HIDDEN_DIM = 32

PAD = 128                       # lane-padded feature width (and padded K dim)
N_LAYERS = 6
BIAS_ROWS = 8                   # each bias replicated over an aligned 8-row group

# Which layers apply tanh (True) vs are purely linear (False).
_LAYER_ACT = (True, True, False, True, True, False)


# ---------------------------------------------------------------------------
# Kernel
# ---------------------------------------------------------------------------
def _autoencoder_kernel(hist_ref, fut_ref, w_ref, b_ref, pred_ref, sse_ref):
    tb = hist_ref.shape[0]
    half = tb // 2

    # Two independent row sub-chains: their MXU / VPU / EUP work lives in
    # different VLIW slots, so Mosaic can interleave them (ILP).
    h0 = hist_ref[0:half, :]          # (half, 128) bf16
    h1 = hist_ref[half:tb, :]         # (half, 128) bf16

    for i, act in enumerate(_LAYER_ACT):
        w = w_ref[i * PAD:(i + 1) * PAD, :]                      # (128,128) bf16, aligned
        # Aligned (8,128) f32 load (bias replicated at pack time), then a
        # register-level row broadcast for the add -- no masked 1-row load.
        b = b_ref[i * BIAS_ROWS:(i + 1) * BIAS_ROWS, :][0:1, :]  # (1,128) f32
        y0 = jnp.dot(h0, w, preferred_element_type=jnp.float32) + b
        y1 = jnp.dot(h1, w, preferred_element_type=jnp.float32) + b
        if act:
            y0 = jnp.tanh(y0)
            y1 = jnp.tanh(y1)
        if i + 1 < N_LAYERS:
            h0 = y0.astype(jnp.bfloat16)   # feed next bf16 MXU matmul
            h1 = y1.astype(jnp.bfloat16)
        else:
            h0, h1 = y0, y1                # final layer output stays f32

    pred_ref[0:half, :] = h0
    pred_ref[half:tb, :] = h1

    # Per-tile squared-error column sums (pad lanes contribute exactly 0).
    d0 = fut_ref[0:half, :] - h0
    d1 = fut_ref[half:tb, :] - h1
    col = (jnp.sum(d0 * d0, axis=0, keepdims=True)
           + jnp.sum(d1 * d1, axis=0, keepdims=True))            # (1,128) f32
    # Replicate over 8 sublanes so the store is a full unmasked (8,128) tile.
    sse_ref[...] = jnp.broadcast_to(col[:, None, :], (1, 8, PAD))


# ---------------------------------------------------------------------------
# Host-side helpers
# ---------------------------------------------------------------------------
def init_params(key):
    """PyTorch-style init: U(-1/sqrt(fan_in), 1/sqrt(fan_in)) for W and b.

    Weights stored pre-transposed as [in, out]; biases as [out].
    """
    dims = [
        (HISTORY_DIM, HIDDEN_DIM),     # linear1
        (HIDDEN_DIM, HIDDEN_DIM),      # linear2
        (HIDDEN_DIM, LATENT_DIM),      # linear3
        (LATENT_DIM, HIDDEN_DIM),      # linear4
        (HIDDEN_DIM, HIDDEN_DIM),      # linear5
        (HIDDEN_DIM, PREDICTION_DIM),  # linear6
    ]
    params = []
    for fan_in, fan_out in dims:
        key, kw, kb = jax.random.split(key, 3)
        bound = float(fan_in) ** -0.5
        w = jax.random.uniform(kw, (fan_in, fan_out), jnp.float32, -bound, bound)
        b = jax.random.uniform(kb, (fan_out,), jnp.float32, -bound, bound)
        params.append((w, b))
    return params


def _pack_params(params):
    """Pack weights into one bf16 slab [768,128]; biases into an f32 slab
    [48,128] with each bias replicated across its aligned 8-row group."""
    w_slab = jnp.zeros((N_LAYERS * PAD, PAD), jnp.float32)
    b_slab = jnp.zeros((N_LAYERS * BIAS_ROWS, PAD), jnp.float32)
    for i, (w, b) in enumerate(params):
        fi, fo = w.shape
        w_slab = w_slab.at[i * PAD:i * PAD + fi, :fo].set(w)
        b_slab = b_slab.at[i * BIAS_ROWS:(i + 1) * BIAS_ROWS, :fo].set(
            jnp.broadcast_to(b[None, :], (BIAS_ROWS, fo)))
    return w_slab.astype(jnp.bfloat16), b_slab


def _select_block_b(B):
    """Generation-aware batch tile: one fat tile on 1-TC chips (v5e/v6e),
    two tiles on v7x (2 TensorCores/chip), capped at 1024 rows."""
    try:
        kind = jax.devices()[0].device_kind.lower()
    except Exception:
        kind = ""
    n_tiles = 2 if "v7" in kind else 1
    blk = min(B // n_tiles, 1024)
    blk = max((blk // 16) * 16, 16)
    while B % blk != 0:          # terminates: B is a multiple of 16
        blk -= 16
    return blk


@functools.partial(jax.jit, static_argnames=("block_b",))
def _forward_impl(history, future, params, *, block_b):
    B = history.shape[0]
    num_tiles = B // block_b

    w_slab, b_slab = _pack_params(params)

    # Lane-pad with exact zeros; history goes straight to bf16 (it feeds the
    # bf16 MXU matmul anyway).  Under jit this fuses with the call's inputs.
    hist_p = jnp.zeros((B, PAD), jnp.bfloat16).at[:, :HISTORY_DIM].set(
        history.astype(jnp.bfloat16))
    fut_p = jnp.zeros((B, PAD), jnp.float32).at[:, :PREDICTION_DIM].set(future)

    # Advisory cost estimate (logical flops, not padded).
    logical_macs = (HISTORY_DIM * HIDDEN_DIM + HIDDEN_DIM * HIDDEN_DIM
                    + HIDDEN_DIM * LATENT_DIM + LATENT_DIM * HIDDEN_DIM
                    + HIDDEN_DIM * HIDDEN_DIM + HIDDEN_DIM * PREDICTION_DIM)
    cost = pl.CostEstimate(
        flops=int(2 * B * logical_macs),
        transcendentals=int(4 * B * HIDDEN_DIM),
        bytes_accessed=int(hist_p.size * 2 + fut_p.size * 4
                           + w_slab.size * 2 + b_slab.size * 4
                           + B * PAD * 4 + num_tiles * 8 * PAD * 4),
    )

    pred_p, sse = pl.pallas_call(
        _autoencoder_kernel,
        out_shape=(
            jax.ShapeDtypeStruct((B, PAD), jnp.float32),             # padded prediction
            jax.ShapeDtypeStruct((num_tiles, 8, PAD), jnp.float32),  # per-tile SSE sums
        ),
        grid=(num_tiles,),
        in_specs=[
            pl.BlockSpec((block_b, PAD), lambda i: (i, 0)),               # history tile (bf16)
            pl.BlockSpec((block_b, PAD), lambda i: (i, 0)),               # future tile (f32)
            pl.BlockSpec((N_LAYERS * PAD, PAD), lambda i: (0, 0)),        # weights (resident)
            pl.BlockSpec((N_LAYERS * BIAS_ROWS, PAD), lambda i: (0, 0)),  # biases (resident)
        ],
        out_specs=(
            pl.BlockSpec((block_b, PAD), lambda i: (i, 0)),
            pl.BlockSpec((1, 8, PAD), lambda i: (i, 0, 0)),
        ),
        compiler_params=pltpu.CompilerParams(
            dimension_semantics=("parallel",)),   # v7x: 2 TCs split the tiles
        cost_estimate=cost,
    )(hist_p, fut_p, w_slab, b_slab)

    # Finish the mean outside the kernel (padded lanes contributed exactly 0).
    loss = jnp.sum(sse[:, 0, :]) / (B * PREDICTION_DIM)
    pred = pred_p[:, :PREDICTION_DIM]
    return loss, pred


def autoencoder_forward(history, future, params):
    """history, future: [B, 30] f32.  Returns (mse_loss_scalar, prediction[B, 30])."""
    B = history.shape[0]
    if B % 16 != 0:
        # A ragged tile would need a row mask so padded rows don't pollute the
        # MSE denominator; keep the guard (see review's correctness note).
        raise ValueError("batch size must be a multiple of 16")
    block_b = _select_block_b(B)
    return _forward_impl(history, future, params, block_b=block_b)


def reference_forward(history, future, params):
    """Pure-JAX reference mirroring the kernel's numerics
    (bf16 MXU matmul with f32 accumulation, f32 bias/tanh/MSE)."""
    h = history
    for (w, b), act in zip(params, _LAYER_ACT):
        y = jnp.dot(h.astype(jnp.bfloat16), w.astype(jnp.bfloat16),
                    preferred_element_type=jnp.float32) + b
        h = jnp.tanh(y) if act else y
    pred = h
    loss = jnp.mean((future - pred) ** 2)
    return loss, pred


# ---------------------------------------------------------------------------
# Demo / self-check
# ---------------------------------------------------------------------------
if __name__ == "__main__":
    key = jax.random.PRNGKey(0)
    kp, kh, kf = jax.random.split(key, 3)

    params = init_params(kp)

    # Batched sinusoid histories (the original script uses a single 30-sample
    # history; we batch to fill the MXU rows / sublanes).
    B = 256
    t = jnp.linspace(0.0, 3.0, HISTORY_DIM)
    amp = jax.random.uniform(kh, (B, 1), jnp.float32, 0.2, 1.0)
    freq = 2.0 * jnp.pi * jax.random.uniform(kf, (B, 1), jnp.float32, 0.1, 1.0)
    history = amp * jnp.sin(freq * t[None, :])            # [B, 30]
    future = amp * jnp.sin(freq * (t[None, :] + 3.0))     # [B, 30]

    loss, pred = autoencoder_forward(history, future, params)
    jax.block_until_ready((loss, pred))

    ref_loss, ref_pred = reference_forward(history, future, params)
    assert pred.shape == (B, PREDICTION_DIM)
    assert jnp.allclose(pred, ref_pred, atol=1e-4, rtol=1e-4)
    assert jnp.allclose(loss, ref_loss, atol=1e-4, rtol=1e-4)

    print("KERNEL_OK")
</pallas_src>

<mosaic_0001>
module attributes {stable_mosaic.version = 11 : i64} {
  func.func @_autoencoder_kernel(%arg0: i32, %arg1: memref<256x128xbf16, #tpu.memory_space<vmem>>, %arg2: memref<256x128xf32, #tpu.memory_space<vmem>>, %arg3: memref<768x128xbf16, #tpu.memory_space<vmem>>, %arg4: memref<48x128xf32, #tpu.memory_space<vmem>>, %arg5: memref<256x128xf32, #tpu.memory_space<vmem>>, %arg6: memref<1x8x128xf32, #tpu.memory_space<vmem>>) attributes {dimension_semantics = [#tpu.dimension_semantics<parallel>], iteration_bounds = array<i64: 1>, scalar_prefetch = 0 : i64, scratch_operands = 0 : i64, tpu.core_type = #tpu.core_type<tc>, window_params = [{transform_indices = @transform_0, window_bounds = array<i64: 256, 128>}, {transform_indices = @transform_1, window_bounds = array<i64: 256, 128>}, {pipeline_mode = #tpu.pipeline_mode<synchronous>, transform_indices = @transform_2, window_bounds = array<i64: 768, 128>}, {pipeline_mode = #tpu.pipeline_mode<synchronous>, transform_indices = @transform_3, window_bounds = array<i64: 48, 128>}, {transform_indices = @transform_4, window_bounds = array<i64: 256, 128>}, {transform_indices = @transform_5, window_bounds = array<i64: 1, 8, 128>}]} {
    %c0 = arith.constant 0 : index
    %c0_0 = arith.constant 0 : index
    %0 = vector.load %arg1[%c0, %c0_0] : memref<256x128xbf16, #tpu.memory_space<vmem>>, vector<128x128xbf16>
    %c128 = arith.constant 128 : index
    %c0_1 = arith.constant 0 : index
    %1 = vector.load %arg1[%c128, %c0_1] : memref<256x128xbf16, #tpu.memory_space<vmem>>, vector<128x128xbf16>
    %c0_2 = arith.constant 0 : index
    %c0_3 = arith.constant 0 : index
    %2 = vector.load %arg3[%c0_2, %c0_3] : memref<768x128xbf16, #tpu.memory_space<vmem>>, vector<128x128xbf16>
    %c0_4 = arith.constant 0 : index
    %c0_5 = arith.constant 0 : index
    %3 = vector.load %arg4[%c0_4, %c0_5] : memref<48x128xf32, #tpu.memory_space<vmem>>, vector<8x128xf32>
    %4 = vector.extract_strided_slice %3 {offsets = [0, 0], sizes = [1, 128], strides = [1, 1]} : vector<8x128xf32> to vector<1x128xf32>
    %cst = arith.constant dense<0.000000e+00> : vector<128x128xf32>
    %5 = tpu.matmul %0, %2, %cst {dimension_numbers = #tpu.dot_dimension_numbers<[1], [0], [0], [1], [0, 0, 1, 1], [], []>} : vector<128x128xbf16>, vector<128x128xbf16>, vector<128x128xf32> -> vector<128x128xf32>
    %6 = vector.broadcast %4 : vector<1x128xf32> to vector<128x128xf32>
    %7 = arith.addf %5, %6 : vector<128x128xf32>
    %cst_6 = arith.constant dense<0.000000e+00> : vector<128x128xf32>
    %8 = tpu.matmul %1, %2, %cst_6 {dimension_numbers = #tpu.dot_dimension_numbers<[1], [0], [0], [1], [0, 0, 1, 1], [], []>} : vector<128x128xbf16>, vector<128x128xbf16>, vector<128x128xf32> -> vector<128x128xf32>
    %9 = vector.broadcast %4 : vector<1x128xf32> to vector<128x128xf32>
    %10 = arith.addf %8, %9 : vector<128x128xf32>
    %11 = math.tanh %7 : vector<128x128xf32>
    %12 = math.tanh %10 : vector<128x128xf32>
    %13 = arith.truncf %11 : vector<128x128xf32> to vector<128x128xbf16>
    %14 = arith.truncf %12 : vector<128x128xf32> to vector<128x128xbf16>
    %c128_7 = arith.constant 128 : index
    %c0_8 = arith.constant 0 : index
    %15 = vector.load %arg3[%c128_7, %c0_8] : memref<768x128xbf16, #tpu.memory_space<vmem>>, vector<128x128xbf16>
    %c8 = arith.constant 8 : index
    %c0_9 = arith.constant 0 : index
    %16 = vector.load %arg4[%c8, %c0_9] : memref<48x128xf32, #tpu.memory_space<vmem>>, vector<8x128xf32>
    %17 = vector.extract_strided_slice %16 {offsets = [0, 0], sizes = [1, 128], strides = [1, 1]} : vector<8x128xf32> to vector<1x128xf32>
    %cst_10 = arith.constant dense<0.000000e+00> : vector<128x128xf32>
    %18 = tpu.matmul %13, %15, %cst_10 {dimension_numbers = #tpu.dot_dimension_numbers<[1], [0], [0], [1], [0, 0, 1, 1], [], []>} : vector<128x128xbf16>, vector<128x128xbf16>, vector<128x128xf32> -> vector<128x128xf32>
    %19 = vector.broadcast %17 : vector<1x128xf32> to vector<128x128xf32>
    %20 = arith.addf %18, %19 : vector<128x128xf32>
    %cst_11 = arith.constant dense<0.000000e+00> : vector<128x128xf32>
    %21 = tpu.matmul %14, %15, %cst_11 {dimension_numbers = #tpu.dot_dimension_numbers<[1], [0], [0], [1], [0, 0, 1, 1], [], []>} : vector<128x128xbf16>, vector<128x128xbf16>, vector<128x128xf32> -> vector<128x128xf32>
    %22 = vector.broadcast %17 : vector<1x128xf32> to vector<128x128xf32>
    %23 = arith.addf %21, %22 : vector<128x128xf32>
    %24 = math.tanh %20 : vector<128x128xf32>
    %25 = math.tanh %23 : vector<128x128xf32>
    %26 = arith.truncf %24 : vector<128x128xf32> to vector<128x128xbf16>
    %27 = arith.truncf %25 : vector<128x128xf32> to vector<128x128xbf16>
    %c256 = arith.constant 256 : index
    %c0_12 = arith.constant 0 : index
    %28 = vector.load %arg3[%c256, %c0_12] : memref<768x128xbf16, #tpu.memory_space<vmem>>, vector<128x128xbf16>
    %c16 = arith.constant 16 : index
    %c0_13 = arith.constant 0 : index
    %29 = vector.load %arg4[%c16, %c0_13] : memref<48x128xf32, #tpu.memory_space<vmem>>, vector<8x128xf32>
    %30 = vector.extract_strided_slice %29 {offsets = [0, 0], sizes = [1, 128], strides = [1, 1]} : vector<8x128xf32> to vector<1x128xf32>
    %cst_14 = arith.constant dense<0.000000e+00> : vector<128x128xf32>
    %31 = tpu.matmul %26, %28, %cst_14 {dimension_numbers = #tpu.dot_dimension_numbers<[1], [0], [0], [1], [0, 0, 1, 1], [], []>} : vector<128x128xbf16>, vector<128x128xbf16>, vector<128x128xf32> -> vector<128x128xf32>
    %32 = vector.broadcast %30 : vector<1x128xf32> to vector<128x128xf32>
    %33 = arith.addf %31, %32 : vector<128x128xf32>
    %cst_15 = arith.constant dense<0.000000e+00> : vector<128x128xf32>
    %34 = tpu.matmul %27, %28, %cst_15 {dimension_numbers = #tpu.dot_dimension_numbers<[1], [0], [0], [1], [0, 0, 1, 1], [], []>} : vector<128x128xbf16>, vector<128x128xbf16>, vector<128x128xf32> -> vector<128x128xf32>
    %35 = vector.broadcast %30 : vector<1x128xf32> to vector<128x128xf32>
    %36 = arith.addf %34, %35 : vector<128x128xf32>
    %37 = arith.truncf %33 : vector<128x128xf32> to vector<128x128xbf16>
    %38 = arith.truncf %36 : vector<128x128xf32> to vector<128x128xbf16>
    %c384 = arith.constant 384 : index
    %c0_16 = arith.constant 0 : index
    %39 = vector.load %arg3[%c384, %c0_16] : memref<768x128xbf16, #tpu.memory_space<vmem>>, vector<128x128xbf16>
    %c24 = arith.constant 24 : index
    %c0_17 = arith.constant 0 : index
    %40 = vector.load %arg4[%c24, %c0_17] : memref<48x128xf32, #tpu.memory_space<vmem>>, vector<8x128xf32>
    %41 = vector.extract_strided_slice %40 {offsets = [0, 0], sizes = [1, 128], strides = [1, 1]} : vector<8x128xf32> to vector<1x128xf32>
    %cst_18 = arith.constant dense<0.000000e+00> : vector<128x128xf32>
    %42 = tpu.matmul %37, %39, %cst_18 {dimension_numbers = #tpu.dot_dimension_numbers<[1], [0], [0], [1], [0, 0, 1, 1], [], []>} : vector<128x128xbf16>, vector<128x128xbf16>, vector<128x128xf32> -> vector<128x128xf32>
    %43 = vector.broadcast %41 : vector<1x128xf32> to vector<128x128xf32>
    %44 = arith.addf %42, %43 : vector<128x128xf32>
    %cst_19 = arith.constant dense<0.000000e+00> : vector<128x128xf32>
    %45 = tpu.matmul %38, %39, %cst_19 {dimension_numbers = #tpu.dot_dimension_numbers<[1], [0], [0], [1], [0, 0, 1, 1], [], []>} : vector<128x128xbf16>, vector<128x128xbf16>, vector<128x128xf32> -> vector<128x128xf32>
    %46 = vector.broadcast %41 : vector<1x128xf32> to vector<128x128xf32>
    %47 = arith.addf %45, %46 : vector<128x128xf32>
    %48 = math.tanh %44 : vector<128x128xf32>
    %49 = math.tanh %47 : vector<128x128xf32>
    %50 = arith.truncf %48 : vector<128x128xf32> to vector<128x128xbf16>
    %51 = arith.truncf %49 : vector<128x128xf32> to vector<128x128xbf16>
    %c512 = arith.constant 512 : index
    %c0_20 = arith.constant 0 : index
    %52 = vector.load %arg3[%c512, %c0_20] : memref<768x128xbf16, #tpu.memory_space<vmem>>, vector<128x128xbf16>
    %c32 = arith.constant 32 : index
    %c0_21 = arith.constant 0 : index
    %53 = vector.load %arg4[%c32, %c0_21] : memref<48x128xf32, #tpu.memory_space<vmem>>, vector<8x128xf32>
    %54 = vector.extract_strided_slice %53 {offsets = [0, 0], sizes = [1, 128], strides = [1, 1]} : vector<8x128xf32> to vector<1x128xf32>
    %cst_22 = arith.constant dense<0.000000e+00> : vector<128x128xf32>
    %55 = tpu.matmul %50, %52, %cst_22 {dimension_numbers = #tpu.dot_dimension_numbers<[1], [0], [0], [1], [0, 0, 1, 1], [], []>} : vector<128x128xbf16>, vector<128x128xbf16>, vector<128x128xf32> -> vector<128x128xf32>
    %56 = vector.broadcast %54 : vector<1x128xf32> to vector<128x128xf32>
    %57 = arith.addf %55, %56 : vector<128x128xf32>
    %cst_23 = arith.constant dense<0.000000e+00> : vector<128x128xf32>
    %58 = tpu.matmul %51, %52, %cst_23 {dimension_numbers = #tpu.dot_dimension_numbers<[1], [0], [0], [1], [0, 0, 1, 1], [], []>} : vector<128x128xbf16>, vector<128x128xbf16>, vector<128x128xf32> -> vector<128x128xf32>
    %59 = vector.broadcast %54 : vector<1x128xf32> to vector<128x128xf32>
    %60 = arith.addf %58, %59 : vector<128x128xf32>
    %61 = math.tanh %57 : vector<128x128xf32>
    %62 = math.tanh %60 : vector<128x128xf32>
    %63 = arith.truncf %61 : vector<128x128xf32> to vector<128x128xbf16>
    %64 = arith.truncf %62 : vector<128x128xf32> to vector<128x128xbf16>
    %c640 = arith.constant 640 : index
    %c0_24 = arith.constant 0 : index
    %65 = vector.load %arg3[%c640, %c0_24] : memref<768x128xbf16, #tpu.memory_space<vmem>>, vector<128x128xbf16>
    %c40 = arith.constant 40 : index
    %c0_25 = arith.constant 0 : index
    %66 = vector.load %arg4[%c40, %c0_25] : memref<48x128xf32, #tpu.memory_space<vmem>>, vector<8x128xf32>
    %67 = vector.extract_strided_slice %66 {offsets = [0, 0], sizes = [1, 128], strides = [1, 1]} : vector<8x128xf32> to vector<1x128xf32>
    %cst_26 = arith.constant dense<0.000000e+00> : vector<128x128xf32>
    %68 = tpu.matmul %63, %65, %cst_26 {dimension_numbers = #tpu.dot_dimension_numbers<[1], [0], [0], [1], [0, 0, 1, 1], [], []>} : vector<128x128xbf16>, vector<128x128xbf16>, vector<128x128xf32> -> vector<128x128xf32>
    %69 = vector.broadcast %67 : vector<1x128xf32> to vector<128x128xf32>
    %70 = arith.addf %68, %69 : vector<128x128xf32>
    %cst_27 = arith.constant dense<0.000000e+00> : vector<128x128xf32>
    %71 = tpu.matmul %64, %65, %cst_27 {dimension_numbers = #tpu.dot_dimension_numbers<[1], [0], [0], [1], [0, 0, 1, 1], [], []>} : vector<128x128xbf16>, vector<128x128xbf16>, vector<128x128xf32> -> vector<128x128xf32>
    %72 = vector.broadcast %67 : vector<1x128xf32> to vector<128x128xf32>
    %73 = arith.addf %71, %72 : vector<128x128xf32>
    %c0_28 = arith.constant 0 : index
    %c0_29 = arith.constant 0 : index
    %74 = vector.load %arg5[%c0_28, %c0_29] : memref<256x128xf32, #tpu.memory_space<vmem>>, vector<128x128xf32>
    tpu.vector_store %arg5[%c0_28, %c0_29], %70 {strides = array<i32>} : memref<256x128xf32, #tpu.memory_space<vmem>>, vector<128x128xf32>,
    %c128_30 = arith.constant 128 : index
    %c0_31 = arith.constant 0 : index
    %75 = vector.load %arg5[%c128_30, %c0_31] : memref<256x128xf32, #tpu.memory_space<vmem>>, vector<128x128xf32>
    tpu.vector_store %arg5[%c128_30, %c0_31], %73 {strides = array<i32>} : memref<256x128xf32, #tpu.memory_space<vmem>>, vector<128x128xf32>,
    %c0_32 = arith.constant 0 : index
    %c0_33 = arith.constant 0 : index
    %76 = vector.load %arg2[%c0_32, %c0_33] : memref<256x128xf32, #tpu.memory_space<vmem>>, vector<128x128xf32>
    %77 = arith.subf %76, %70 : vector<128x128xf32>
    %c128_34 = arith.constant 128 : index
    %c0_35 = arith.constant 0 : index
    %78 = vector.load %arg2[%c128_34, %c0_35] : memref<256x128xf32, #tpu.memory_space<vmem>>, vector<128x128xf32>
    %79 = arith.subf %78, %73 : vector<128x128xf32>
    %80 = arith.mulf %77, %77 : vector<128x128xf32>
    %cst_36 = arith.constant dense<0.000000e+00> : vector<128xf32>
    %81 = vector.multi_reduction <add>, %80, %cst_36 [0] : vector<128x128xf32> to vector<128xf32>
    %82 = vector.shape_cast %81 : vector<128xf32> to vector<1x128xf32>
    %83 = arith.mulf %79, %79 : vector<128x128xf32>
    %cst_37 = arith.constant dense<0.000000e+00> : vector<128xf32>
    %84 = vector.multi_reduction <add>, %83, %cst_37 [0] : vector<128x128xf32> to vector<128xf32>
    %85 = vector.shape_cast %84 : vector<128xf32> to vector<1x128xf32>
    %86 = arith.addf %82, %85 : vector<1x128xf32>
    %87 = vector.shape_cast %86 : vector<1x128xf32> to vector<1x1x128xf32>
    %88 = vector.shape_cast %87 : vector<1x1x128xf32> to vector<1x1x128xf32>
    %89 = vector.broadcast %88 : vector<1x1x128xf32> to vector<1x8x128xf32>
    %c0_38 = arith.constant 0 : index
    %c0_39 = arith.constant 0 : index
    %c0_40 = arith.constant 0 : index
    %90 = vector.load %arg6[%c0_38, %c0_39, %c0_40] : memref<1x8x128xf32, #tpu.memory_space<vmem>>, vector<1x8x128xf32>
    tpu.vector_store %arg6[%c0_38, %c0_39, %c0_40], %89 {strides = array<i32>} : memref<1x8x128xf32, #tpu.memory_space<vmem>>, vector<1x8x128xf32>,
    return
  }
  func.func @transform_0(%arg0: i32) -> (i32, i32) {
    %c0_i32 = arith.constant 0 : i32
    %c0_i32_0 = arith.constant 0 : i32
    return %arg0, %c0_i32 : i32, i32
  }
  func.func @transform_1(%arg0: i32) -> (i32, i32) {
    %c0_i32 = arith.constant 0 : i32
    %c0_i32_0 = arith.constant 0 : i32
    return %arg0, %c0_i32 : i32, i32
  }
  func.func @transform_2(%arg0: i32) -> (i32, i32) {
    %c0_i32 = arith.constant 0 : i32
    %c0_i32_0 = arith.constant 0 : i32
    %c0_i32_1 = arith.constant 0 : i32
    return %c0_i32, %c0_i32_0 : i32, i32
  }
  func.func @transform_3(%arg0: i32) -> (i32, i32) {
    %c0_i32 = arith.constant 0 : i32
    %c0_i32_0 = arith.constant 0 : i32
    %c0_i32_1 = arith.constant 0 : i32
    return %c0_i32, %c0_i32_0 : i32, i32
  }
  func.func @transform_4(%arg0: i32) -> (i32, i32) {
    %c0_i32 = arith.constant 0 : i32
    %c0_i32_0 = arith.constant 0 : i32
    return %arg0, %c0_i32 : i32, i32
  }
  func.func @transform_5(%arg0: i32) -> (i32, i32, i32) {
    %c0_i32 = arith.constant 0 : i32
    %c0_i32_0 = arith.constant 0 : i32
    %c0_i32_1 = arith.constant 0 : i32
    return %arg0, %c0_i32, %c0_i32_0 : i32, i32, i32
  }
}

</mosaic_0001>

<llo_original>
// kernel: _forward_impl.1
$region0: #{_forward_impl.1}
  #allocation0 [shape = 'u32[]', space=smem, size = 0x4, offset = 0x4, fixed_abs, tag = 'smem constant byte address 0x4 - core index']
  #allocation1 [shape = 'u32[144,128]{1,0:T(1,128)}', space=vmem, size = 0x12000, scoped, tag = 'internal scratch']
  %s0 = inlined_call_operand.vmem [shape: bf16[256,128], index: 0, kind: input, shape index: {}]
  %s1 = inlined_call_operand.vmem [shape: f32[256,128], index: 1, kind: input, shape index: {}]
  %s2 = inlined_call_operand.vmem [shape: bf16[768,128], index: 2, kind: input, shape index: {}]
  %s3 = inlined_call_operand.vmem [shape: f32[48,128], index: 3, kind: input, shape index: {}]
  %s4 = inlined_call_operand.vmem [shape: f32[256,128], index: 4, kind: output, shape index: {0}]
  %s5 = inlined_call_operand.vmem [shape: f32[1,8,128], index: 5, kind: output, shape index: {1}]
  %6 = xla_tuple %s4, %s5
  %s7 = sld [smem:[#allocation0]]
  $region34: #{_forward_impl.1} parent=0
    _
  %s9 = ssub.s32 1, %s7
  %s10 = scalar_select 0, %s9, %s7
  // Predicated region
  $region2: #{_forward_impl.1} parent=0 // pred_check
    _
  $region3: #{_forward_impl.1} parent=0 // pred_check_branch
    %12 = sbr.rel (0) target = $region5
  $region4: #{_forward_impl.1} parent=0 // pred_region
    _
  $region5: #{_forward_impl.1} parent=0 // pred_fallthru
    _
  // Predicated region
  $region6: #{_forward_impl.1} parent=0 // pred_check
    _
  $region7: #{_forward_impl.1} parent=0 // pred_check_branch
    %14 = sbr.rel (0) target = $region9
  $region8: #{_forward_impl.1} parent=0 // pred_region
    _
  $region9: #{_forward_impl.1} parent=0 // pred_fallthru
    _
  // Predicated region
  $region10: #{_forward_impl.1} parent=0 // pred_check
    _
  $region11: #{_forward_impl.1} parent=0 // pred_check_branch
    %16 = sbr.rel (0) target = $region13
  $region12: #{_forward_impl.1} parent=0 // pred_region
    _
  $region13: #{_forward_impl.1} parent=0 // pred_fallthru
    _
  // Predicated region
  $region14: #{_forward_impl.1} parent=0 // pred_check
    _
  $region15: #{_forward_impl.1} parent=0 // pred_check_branch
    %18 = sbr.rel (0) target = $region17
  $region16: #{_forward_impl.1} parent=0 // pred_region
    _
  $region17: #{_forward_impl.1} parent=0 // pred_fallthru
    _
  %v20 = vld [vmem:[%s0] sm:$0xf]
  %v21 = vld [vmem:[%s0 + $0x4] sm:$0xf]
  %v22 = vld [vmem:[%s0 + $0x8] sm:$0xf]
  %v23 = vld [vmem:[%s0 + $0xc] sm:$0xf]
  %v24 = vld [vmem:[%s0 + $0x10] sm:$0xf]
  %v25 = vld [vmem:[%s0 + $0x14] sm:$0xf]
  %v26 = vld [vmem:[%s0 + $0x18] sm:$0xf]
  %v27 = vld [vmem:[%s0 + $0x1c] sm:$0xf]
  %v28 = vld [vmem:[%s0 + $0x20] sm:$0xf]
  %v29 = vld [vmem:[%s0 + $0x24] sm:$0xf]
  %v30 = vld [vmem:[%s0 + $0x28] sm:$0xf]
  %v31 = vld [vmem:[%s0 + $0x2c] sm:$0xf]
  %v32 = vld [vmem:[%s0 + $0x30] sm:$0xf]
  %v33 = vld [vmem:[%s0 + $0x34] sm:$0xf]
  %v34 = vld [vmem:[%s0 + $0x38] sm:$0xf]
  %v35 = vld [vmem:[%s0 + $0x3c] sm:$0xf]
  %v36 = vld [vmem:[%s0 + $0x40] sm:$0xf]
  %v37 = vld [vmem:[%s0 + $0x44] sm:$0xf]
  %v38 = vld [vmem:[%s0 + $0x48] sm:$0xf]
  %v39 = vld [vmem:[%s0 + $0x4c] sm:$0xf]
  %v40 = vld [vmem:[%s0 + $0x50] sm:$0xf]
  %v41 = vld [vmem:[%s0 + $0x54] sm:$0xf]
  %v42 = vld [vmem:[%s0 + $0x58] sm:$0xf]
  %v43 = vld [vmem:[%s0 + $0x5c] sm:$0xf]
  %v44 = vld [vmem:[%s0 + $0x60] sm:$0xf]
  %v45 = vld [vmem:[%s0 + $0x64] sm:$0xf]
  %v46 = vld [vmem:[%s0 + $0x68] sm:$0xf]
  %v47 = vld [vmem:[%s0 + $0x6c] sm:$0xf]
  %v48 = vld [vmem:[%s0 + $0x70] sm:$0xf]
  %v49 = vld [vmem:[%s0 + $0x74] sm:$0xf]
  %v50 = vld [vmem:[%s0 + $0x78] sm:$0xf]
  %v51 = vld [vmem:[%s0 + $0x7c] sm:$0xf]
  %v52 = vld [vmem:[%s2] sm:$0xf]
  %v53 = vld [vmem:[%s2 + $0x4] sm:$0xf]
  %v54 = vld [vmem:[%s2 + $0x8] sm:$0xf]
  %v55 = vld [vmem:[%s2 + $0xc] sm:$0xf]
  %v56 = vld [vmem:[%s2 + $0x10] sm:$0xf]
  %v57 = vld [vmem:[%s2 + $0x14] sm:$0xf]
  %v58 = vld [vmem:[%s2 + $0x18] sm:$0xf]
  %v59 = vld [vmem:[%s2 + $0x1c] sm:$0xf]
  %v60 = vld [vmem:[%s2 + $0x20] sm:$0xf]
  %v61 = vld [vmem:[%s2 + $0x24] sm:$0xf]
  %v62 = vld [vmem:[%s2 + $0x28] sm:$0xf]
  %v63 = vld [vmem:[%s2 + $0x2c] sm:$0xf]
  %v64 = vld [vmem:[%s2 + $0x30] sm:$0xf]
  %v65 = vld [vmem:[%s2 + $0x34] sm:$0xf]
  %v66 = vld [vmem:[%s2 + $0x38] sm:$0xf]
  %v67 = vld [vmem:[%s2 + $0x3c] sm:$0xf]
  %v68 = vld [vmem:[%s3] sm:$0xff]
  %v69 = vlaneseq
  %v70 = vshrl.u32 %v69, 7
  %v71 = vsub.s32 0, %v70
  %v72 = vrot.slane %v68, %v71
  %v89 = vunpack.c.l.b16 %v20
  %v90 = vunpack.c.l.b16 %v21
  %v91 = vunpack.c.l.b16 %v22
  %v92 = vunpack.c.l.b16 %v23
  %v93 = vunpack.c.l.b16 %v24
  %v94 = vunpack.c.l.b16 %v25
  %v95 = vunpack.c.l.b16 %v26
  %v96 = vunpack.c.l.b16 %v27
  %v97 = vunpack.c.l.b16 %v28
  %v98 = vunpack.c.l.b16 %v29
  %v99 = vunpack.c.l.b16 %v30
  %v100 = vunpack.c.l.b16 %v31
  %v101 = vunpack.c.l.b16 %v32
  %v102 = vunpack.c.l.b16 %v33
  %v103 = vunpack.c.l.b16 %v34
  %v104 = vunpack.c.l.b16 %v35
  %v105 = vpack.c.b16 %v90, %v89
  %v106 = vpack.c.b16 %v92, %v91
  %v107 = vpack.c.b16 %v94, %v93
  %v108 = vpack.c.b16 %v96, %v95
  %v109 = vpack.c.b16 %v98, %v97
  %v110 = vpack.c.b16 %v100, %v99
  %v111 = vpack.c.b16 %v102, %v101
  %v112 = vpack.c.b16 %v104, %v103
  %v137 = vunpack.c.l.b16 %v52
  %v138 = vunpack.c.l.b16 %v53
  %v139 = vunpack.c.l.b16 %v54
  %v140 = vunpack.c.l.b16 %v55
  %v141 = vunpack.c.l.b16 %v56
  %v142 = vunpack.c.l.b16 %v57
  %v143 = vunpack.c.l.b16 %v58
  %v144 = vunpack.c.l.b16 %v59
  %v145 = vunpack.c.l.b16 %v60
  %v146 = vunpack.c.l.b16 %v61
  %v147 = vunpack.c.l.b16 %v62
  %v148 = vunpack.c.l.b16 %v63
  %v149 = vunpack.c.l.b16 %v64
  %v150 = vunpack.c.l.b16 %v65
  %v151 = vunpack.c.l.b16 %v66
  %v152 = vunpack.c.l.b16 %v67
  %v153 = vpack.c.b16 %v138, %v137
  %v154 = vpack.c.b16 %v140, %v139
  %v155 = vpack.c.b16 %v142, %v141
  %v156 = vpack.c.b16 %v144, %v143
  %v157 = vpack.c.b16 %v146, %v145
  %v158 = vpack.c.b16 %v148, %v147
  %v159 = vpack.c.b16 %v150, %v149
  %v160 = vpack.c.b16 %v152, %v151
  %169 = vmatprep.subr.bf16.mxu0 0
  %170 = vmatpush1.bf16.msra.mxu0 %v153
  %171 = vmatprep.subr.bf16.mxu0 0
  %172 = vmatpush1.bf16.msra.mxu0 %v154
  %173 = vmatprep.subr.bf16.mxu0 0
  %174 = vmatpush1.bf16.msra.mxu0 %v155
  %175 = vmatprep.subr.bf16.mxu0 0
  %176 = vmatpush1.bf16.msra.mxu0 %v156
  %177 = vmatprep.subr.bf16.mxu0 0
  %178 = vmatpush1.bf16.msra.mxu0 %v157
  %179 = vmatprep.subr.bf16.mxu0 0
  %180 = vmatpush1.bf16.msra.mxu0 %v158
  %181 = vmatprep.subr.bf16.mxu0 0
  %182 = vmatpush1.bf16.msra.mxu0 %v159
  %183 = vmatprep.subr.bf16.mxu0 0
  %184 = vmatpush1.bf16.msra.mxu0 %v160
  %185 = vmatprep.subr.bf16.mxu0 0
  %186 = vmatpush1.bf16.msra.mxu0 0
  %187 = vmatprep.subr.bf16.mxu0 0
  %188 = vmatpush1.bf16.msra.mxu0 0
  %189 = vmatprep.subr.bf16.mxu0 0
  %190 = vmatpush1.bf16.msra.mxu0 0
  %191 = vmatprep.subr.bf16.mxu0 0
  %192 = vmatpush1.bf16.msra.mxu0 0
  %193 = vmatprep.subr.bf16.mxu0 0
  %194 = vmatpush1.bf16.msra.mxu0 0
  %195 = vmatprep.subr.bf16.mxu0 0
  %196 = vmatpush1.bf16.msra.mxu0 0
  %197 = vmatprep.subr.bf16.mxu0 0
  %198 = vmatpush1.bf16.msra.mxu0 0
  %199 = vmatprep.subr.bf16.mxu0 0
  %200 = vmatpush1.bf16.msra.mxu0 0
  %201 = vmatprep.mubr.bf16.mxu0 0
  %202 = vmatmul.mubr.bf16.gmra.mrb[0].mxu0 %v105
  %v203 = vpop.f32.mrb[0].mxu0
  %v204 = vadd.f32 %v72, %v203
  %v205 = vpop.f32.mrb[0].mxu0
  %v206 = vpop.f32.mrb[0].mxu0
  %v207 = vadd.f32 %v72, %v206
  %v208 = vpop.f32.mrb[0].mxu0
  %209 = vmatprep.mubr.bf16.mxu0 0
  %210 = vmatmul.mubr.bf16.gmra.mrb[0].mxu0 %v106
  %v211 = vpop.f32.mrb[0].mxu0
  %v212 = vadd.f32 %v72, %v211
  %v213 = vpop.f32.mrb[0].mxu0
  %v214 = vpop.f32.mrb[0].mxu0
  %v215 = vadd.f32 %v72, %v214
  %v216 = vpop.f32.mrb[0].mxu0
  %217 = vmatprep.mubr.bf16.mxu0 0
  %218 = vmatmul.mubr.bf16.gmra.mrb[0].mxu0 %v107
  %v219 = vpop.f32.mrb[0].mxu0
  %v220 = vadd.f32 %v72, %v219
  %v221 = vpop.f32.mrb[0].mxu0
  %v222 = vpop.f32.mrb[0].mxu0
  %v223 = vadd.f32 %v72, %v222
  %v224 = vpop.f32.mrb[0].mxu0
  %225 = vmatprep.mubr.bf16.mxu0 0
  %226 = vmatmul.mubr.bf16.gmra.mrb[0].mxu0 %v108
  %v227 = vpop.f32.mrb[0].mxu0
  %v228 = vadd.f32 %v72, %v227
  %v229 = vpop.f32.mrb[0].mxu0
  %v230 = vpop.f32.mrb[0].mxu0
  %v231 = vadd.f32 %v72, %v230
  %v232 = vpop.f32.mrb[0].mxu0
  %233 = vmatprep.mubr.bf16.mxu0 0
  %234 = vmatmul.mubr.bf16.gmra.mrb[0].mxu0 %v109
  %v235 = vpop.f32.mrb[0].mxu0
  %v236 = vadd.f32 %v72, %v235
  %v237 = vpop.f32.mrb[0].mxu0
  %v238 = vpop.f32.mrb[0].mxu0
  %v239 = vadd.f32 %v72, %v238
  %v240 = vpop.f32.mrb[0].mxu0
  %241 = vmatprep.mubr.bf16.mxu0 0
  %242 = vmatmul.mubr.bf16.gmra.mrb[0].mxu0 %v110
  %v243 = vpop.f32.mrb[0].mxu0
  %v244 = vadd.f32 %v72, %v243
  %v245 = vpop.f32.mrb[0].mxu0
  %v246 = vpop.f32.mrb[0].mxu0
  %v247 = vadd.f32 %v72, %v246
  %v248 = vpop.f32.mrb[0].mxu0
  %249 = vmatprep.mubr.bf16.mxu0 0
  %250 = vmatmul.mubr.bf16.gmra.mrb[0].mxu0 %v111
  %v251 = vpop.f32.mrb[0].mxu0
  %v252 = vadd.f32 %v72, %v251
  %v253 = vpop.f32.mrb[0].mxu0
  %v254 = vpop.f32.mrb[0].mxu0
  %v255 = vadd.f32 %v72, %v254
  %v256 = vpop.f32.mrb[0].mxu0
  %257 = vmatprep.mubr.bf16.mxu0 0
  %258 = vmatmul.mubr.bf16.gmra.mrb[0].mxu0 %v112
  %v259 = vpop.f32.mrb[0].mxu0
  %v260 = vadd.f32 %v72, %v259
  %v261 = vpop.f32.mrb[0].mxu0
  %v262 = vpop.f32.mrb[0].mxu0
  %v263 = vadd.f32 %v72, %v262
  %v264 = vpop.f32.mrb[0].mxu0
  %265 = vdwg.mxu0
  %v282 = vunpack.c.l.b16 %v36
  %v283 = vunpack.c.l.b16 %v37
  %v284 = vunpack.c.l.b16 %v38
  %v285 = vunpack.c.l.b16 %v39
  %v286 = vunpack.c.l.b16 %v40
  %v287 = vunpack.c.l.b16 %v41
  %v288 = vunpack.c.l.b16 %v42
  %v289 = vunpack.c.l.b16 %v43
  %v290 = vunpack.c.l.b16 %v44
  %v291 = vunpack.c.l.b16 %v45
  %v292 = vunpack.c.l.b16 %v46
  %v293 = vunpack.c.l.b16 %v47
  %v294 = vunpack.c.l.b16 %v48
  %v295 = vunpack.c.l.b16 %v49
  %v296 = vunpack.c.l.b16 %v50
  %v297 = vunpack.c.l.b16 %v51
  %v298 = vpack.c.b16 %v283, %v282
  %v299 = vpack.c.b16 %v285, %v284
  %v300 = vpack.c.b16 %v287, %v286
  %v301 = vpack.c.b16 %v289, %v288
  %v302 = vpack.c.b16 %v291, %v290
  %v303 = vpack.c.b16 %v293, %v292
  %v304 = vpack.c.b16 %v295, %v294
  %v305 = vpack.c.b16 %v297, %v296
  %314 = vmatprep.subr.bf16.mxu0 0
  %315 = vmatpush1.bf16.msra.mxu0 %v153
  %316 = vmatprep.subr.bf16.mxu0 0
  %317 = vmatpush1.bf16.msra.mxu0 %v154
  %318 = vmatprep.subr.bf16.mxu0 0
  %319 = vmatpush1.bf16.msra.mxu0 %v155
  %320 = vmatprep.subr.bf16.mxu0 0
  %321 = vmatpush1.bf16.msra.mxu0 %v156
  %322 = vmatprep.subr.bf16.mxu0 0
  %323 = vmatpush1.bf16.msra.mxu0 %v157
  %324 = vmatprep.subr.bf16.mxu0 0
  %325 = vmatpush1.bf16.msra.mxu0 %v158
  %326 = vmatprep.subr.bf16.mxu0 0
  %327 = vmatpush1.bf16.msra.mxu0 %v159
  %328 = vmatprep.subr.bf16.mxu0 0
  %329 = vmatpush1.bf16.msra.mxu0 %v160
  %330 = vmatprep.subr.bf16.mxu0 0
  %331 = vmatpush1.bf16.msra.mxu0 0
  %332 = vmatprep.subr.bf16.mxu0 0
  %333 = vmatpush1.bf16.msra.mxu0 0
  %334 = vmatprep.subr.bf16.mxu0 0
  %335 = vmatpush1.bf16.msra.mxu0 0
  %336 = vmatprep.subr.bf16.mxu0 0
  %337 = vmatpush1.bf16.msra.mxu0 0
  %338 = vmatprep.subr.bf16.mxu0 0
  %339 = vmatpush1.bf16.msra.mxu0 0
  %340 = vmatprep.subr.bf16.mxu0 0
  %341 = vmatpush1.bf16.msra.mxu0 0
  %342 = vmatprep.subr.bf16.mxu0 0
  %343 = vmatpush1.bf16.msra.mxu0 0
  %344 = vmatprep.subr.bf16.mxu0 0
  %345 = vmatpush1.bf16.msra.mxu0 0
  %346 = vmatprep.mubr.bf16.mxu0 0
  %347 = vmatmul.mubr.bf16.gmra.mrb[0].mxu0 %v298
  %v348 = vpop.f32.mrb[0].mxu0
  %v349 = vadd.f32 %v72, %v348
  %v350 = vpop.f32.mrb[0].mxu0
  %v351 = vpop.f32.mrb[0].mxu0
  %v352 = vadd.f32 %v72, %v351
  %v353 = vpop.f32.mrb[0].mxu0
  %354 = vmatprep.mubr.bf16.mxu0 0
  %355 = vmatmul.mubr.bf16.gmra.mrb[0].mxu0 %v299
  %v356 = vpop.f32.mrb[0].mxu0
  %v357 = vadd.f32 %v72, %v356
  %v358 = vpop.f32.mrb[0].mxu0
  %v359 = vpop.f32.mrb[0].mxu0
  %v360 = vadd.f32 %v72, %v359
  %v361 = vpop.f32.mrb[0].mxu0
  %362 = vmatprep.mubr.bf16.mxu0 0
  %363 = vmatmul.mubr.bf16.gmra.mrb[0].mxu0 %v300
  %v364 = vpop.f32.mrb[0].mxu0
  %v365 = vadd.f32 %v72, %v364
  %v366 = vpop.f32.mrb[0].mxu0
  %v367 = vpop.f32.mrb[0].mxu0
  %v368 = vadd.f32 %v72, %v367
  %v369 = vpop.f32.mrb[0].mxu0
  %370 = vmatprep.mubr.bf16.mxu0 0
  %371 = vmatmul.mubr.bf16.gmra.mrb[0].mxu0 %v301
  %v372 = vpop.f32.mrb[0].mxu0
  %v373 = vadd.f32 %v72, %v372
  %v374 = vpop.f32.mrb[0].mxu0
  %v375 = vpop.f32.mrb[0].mxu0
  %v376 = vadd.f32 %v72, %v375
  %v377 = vpop.f32.mrb[0].mxu0
  %378 = vmatprep.mubr.bf16.mxu0 0
  %379 = vmatmul.mubr.bf16.gmra.mrb[0].mxu0 %v302
  %v380 = vpop.f32.mrb[0].mxu0
  %v381 = vadd.f32 %v72, %v380
  %v382 = vpop.f32.mrb[0].mxu0
  %v383 = vpop.f32.mrb[0].mxu0
  %v384 = vadd.f32 %v72, %v383
  %v385 = vpop.f32.mrb[0].mxu0
  %386 = vmatprep.mubr.bf16.mxu0 0
  %387 = vmatmul.mubr.bf16.gmra.mrb[0].mxu0 %v303
  %v388 = vpop.f32.mrb[0].mxu0
  %v389 = vadd.f32 %v72, %v388
  %v390 = vpop.f32.mrb[0].mxu0
  %v391 = vpop.f32.mrb[0].mxu0
  %v392 = vadd.f32 %v72, %v391
  %v393 = vpop.f32.mrb[0].mxu0
  %394 = vmatprep.mubr.bf16.mxu0 0
  %395 = vmatmul.mubr.bf16.gmra.mrb[0].mxu0 %v304
  %v396 = vpop.f32.mrb[0].mxu0
  %v397 = vadd.f32 %v72, %v396
  %v398 = vpop.f32.mrb[0].mxu0
  %v399 = vpop.f32.mrb[0].mxu0
  %v400 = vadd.f32 %v72, %v399
  %v401 = vpop.f32.mrb[0].mxu0
  %402 = vmatprep.mubr.bf16.mxu0 0
  %403 = vmatmul.mubr.bf16.gmra.mrb[0].mxu0 %v305
  %v404 = vpop.f32.mrb[0].mxu0
  %v405 = vadd.f32 %v72, %v404
  %v406 = vpop.f32.mrb[0].mxu0
  %v407 = vpop.f32.mrb[0].mxu0
  %v408 = vadd.f32 %v72, %v407
  %v409 = vpop.f32.mrb[0].mxu0
  %410 = vdwg.mxu0
  %v411 = vtanh.pop %v204
  %v412 = vtanh.pop %v207
  %v413 = vtanh.pop %v212
  %v414 = vtanh.pop %v215
  %v415 = vtanh.pop %v220
  %v416 = vtanh.pop %v223
  %v417 = vtanh.pop %v228
  %v418 = vtanh.pop %v231
  %v419 = vtanh.pop %v236
  %v420 = vtanh.pop %v239
  %v421 = vtanh.pop %v244
  %v422 = vtanh.pop %v247
  %v423 = vtanh.pop %v252
  %v424 = vtanh.pop %v255
  %v425 = vtanh.pop %v260
  %v426 = vtanh.pop %v263
  %v427 = vtanh.pop %v349
  %v428 = vtanh.pop %v352
  %v429 = vtanh.pop %v357
  %v430 = vtanh.pop %v360
  %v431 = vtanh.pop %v365
  %v432 = vtanh.pop %v368
  %v433 = vtanh.pop %v373
  %v434 = vtanh.pop %v376
  %v435 = vtanh.pop %v381
  %v436 = vtanh.pop %v384
  %v437 = vtanh.pop %v389
  %v438 = vtanh.pop %v392
  %v439 = vtanh.pop %v397
  %v440 = vtanh.pop %v400
  %v441 = vtanh.pop %v405
  %v442 = vtanh.pop %v408
  %v443 = vpack.c.bf16 %v412, %v411
  %v444 = vpack.c.bf16 %v414, %v413
  %v445 = vpack.c.bf16 %v416, %v415
  %v446 = vpack.c.bf16 %v418, %v417
  %v447 = vpack.c.bf16 %v420, %v419
  %v448 = vpack.c.bf16 %v422, %v421
  %v449 = vpack.c.bf16 %v424, %v423
  %v450 = vpack.c.bf16 %v426, %v425
  %v451 = vpack.c.bf16 %v428, %v427
  %v452 = vpack.c.bf16 %v430, %v429
  %v453 = vpack.c.bf16 %v432, %v431
  %v454 = vpack.c.bf16 %v434, %v433
  %v455 = vpack.c.bf16 %v436, %v435
  %v456 = vpack.c.bf16 %v438, %v437
  %v457 = vpack.c.bf16 %v440, %v439
  %v458 = vpack.c.bf16 %v442, %v441
  %v459 = vld [vmem:[%s2 + $0x40] sm:$0xf]
  %v460 = vld [vmem:[%s2 + $0x44] sm:$0xf]
  %v461 = vld [vmem:[%s2 + $0x48] sm:$0xf]
  %v462 = vld [vmem:[%s2 + $0x4c] sm:$0xf]
  %v463 = vld [vmem:[%s2 + $0x50] sm:$0xf]
  %v464 = vld [vmem:[%s2 + $0x54] sm:$0xf]
  %v465 = vld [vmem:[%s2 + $0x58] sm:$0xf]
  %v466 = vld [vmem:[%s2 + $0x5c] sm:$0xf]
  %v467 = vld [vmem:[%s2 + $0x60] sm:$0xf]
  %v468 = vld [vmem:[%s2 + $0x64] sm:$0xf]
  %v469 = vld [vmem:[%s2 + $0x68] sm:$0xf]
  %v470 = vld [vmem:[%s2 + $0x6c] sm:$0xf]
  %v471 = vld [vmem:[%s2 + $0x70] sm:$0xf]
  %v472 = vld [vmem:[%s2 + $0x74] sm:$0xf]
  %v473 = vld [vmem:[%s2 + $0x78] sm:$0xf]
  %v474 = vld [vmem:[%s2 + $0x7c] sm:$0xf]
  %v475 = vld [vmem:[%s3 + $0x8] sm:$0xff]
  %v476 = vlaneseq
  %v477 = vshrl.u32 %v476, 7
  %v478 = vsub.s32 0, %v477
  %v479 = vrot.slane %v475, %v478
  %v496 = vunpack.c.l.b16 %v459
  %v497 = vunpack.c.l.b16 %v460
  %v498 = vunpack.c.l.b16 %v461
  %v499 = vunpack.c.l.b16 %v462
  %v500 = vunpack.c.l.b16 %v463
  %v501 = vunpack.c.l.b16 %v464
  %v502 = vunpack.c.l.b16 %v465
  %v503 = vunpack.c.l.b16 %v466
  %v504 = vunpack.c.l.b16 %v467
  %v505 = vunpack.c.l.b16 %v468
  %v506 = vunpack.c.l.b16 %v469
  %v507 = vunpack.c.l.b16 %v470
  %v508 = vunpack.c.l.b16 %v471
  %v509 = vunpack.c.l.b16 %v472
  %v510 = vunpack.c.l.b16 %v473
  %v511 = vunpack.c.l.b16 %v474
  %v512 = vpack.c.b16 %v497, %v496
  %v513 = vpack.c.b16 %v499, %v498
  %v514 = vpack.c.b16 %v501, %v500
  %v515 = vpack.c.b16 %v503, %v502
  %v516 = vpack.c.b16 %v505, %v504
  %v517 = vpack.c.b16 %v507, %v506
  %v518 = vpack.c.b16 %v509, %v508
  %v519 = vpack.c.b16 %v511, %v510
  %528 = vmatprep.subr.bf16.mxu0 0
  %529 = vmatpush1.bf16.msra.mxu0 %v512
  %530 = vmatprep.subr.bf16.mxu0 0
  %531 = vmatpush1.bf16.msra.mxu0 %v513
  %532 = vmatprep.subr.bf16.mxu0 0
  %533 = vmatpush1.bf16.msra.mxu0 %v514
  %534 = vmatprep.subr.bf16.mxu0 0
  %535 = vmatpush1.bf16.msra.mxu0 %v515
  %536 = vmatprep.subr.bf16.mxu0 0
  %537 = vmatpush1.bf16.msra.mxu0 %v516
  %538 = vmatprep.subr.bf16.mxu0 0
  %539 = vmatpush1.bf16.msra.mxu0 %v517
  %540 = vmatprep.subr.bf16.mxu0 0
  %541 = vmatpush1.bf16.msra.mxu0 %v518
  %542 = vmatprep.subr.bf16.mxu0 0
  %543 = vmatpush1.bf16.msra.mxu0 %v519
  %544 = vmatprep.subr.bf16.mxu0 0
  %545 = vmatpush1.bf16.msra.mxu0 0
  %546 = vmatprep.subr.bf16.mxu0 0
  %547 = vmatpush1.bf16.msra.mxu0 0
  %548 = vmatprep.subr.bf16.mxu0 0
  %549 = vmatpush1.bf16.msra.mxu0 0
  %550 = vmatprep.subr.bf16.mxu0 0
  %551 = vmatpush1.bf16.msra.mxu0 0
  %552 = vmatprep.subr.bf16.mxu0 0
  %553 = vmatpush1.bf16.msra.mxu0 0
  %554 = vmatprep.subr.bf16.mxu0 0
  %555 = vmatpush1.bf16.msra.mxu0 0
  %556 = vmatprep.subr.bf16.mxu0 0
  %557 = vmatpush1.bf16.msra.mxu0 0
  %558 = vmatprep.subr.bf16.mxu0 0
  %559 = vmatpush1.bf16.msra.mxu0 0
  %560 = vmatprep.mubr.bf16.mxu0 0
  %561 = vmatmul.mubr.bf16.gmra.mrb[0].mxu0 %v443
  %v562 = vpop.f32.mrb[0].mxu0
  %v563 = vadd.f32 %v479, %v562
  %v564 = vpop.f32.mrb[0].mxu0
  %v565 = vpop.f32.mrb[0].mxu0
  %v566 = vadd.f32 %v479, %v565
  %v567 = vpop.f32.mrb[0].mxu0
  %568 = vmatprep.mubr.bf16.mxu0 0
  %569 = vmatmul.mubr.bf16.gmra.mrb[0].mxu0 %v444
  %v570 = vpop.f32.mrb[0].mxu0
  %v571 = vadd.f32 %v479, %v570
  %v572 = vpop.f32.mrb[0].mxu0
  %v573 = vpop.f32.mrb[0].mxu0
  %v574 = vadd.f32 %v479, %v573
  %v575 = vpop.f32.mrb[0].mxu0
  %576 = vmatprep.mubr.bf16.mxu0 0
  %577 = vmatmul.mubr.bf16.gmra.mrb[0].mxu0 %v445
  %v578 = vpop.f32.mrb[0].mxu0
  %v579 = vadd.f32 %v479, %v578
  %v580 = vpop.f32.mrb[0].mxu0
  %v581 = vpop.f32.mrb[0].mxu0
  %v582 = vadd.f32 %v479, %v581
  %v583 = vpop.f32.mrb[0].mxu0
  %584 = vmatprep.mubr.bf16.mxu0 0
  %585 = vmatmul.mubr.bf16.gmra.mrb[0].mxu0 %v446
  %v586 = vpop.f32.mrb[0].mxu0
  %v587 = vadd.f32 %v479, %v586
  %v588 = vpop.f32.mrb[0].mxu0
  %v589 = vpop.f32.mrb[0].mxu0
  %v590 = vadd.f32 %v479, %v589
  %v591 = vpop.f32.mrb[0].mxu0
  %592 = vmatprep.mubr.bf16.mxu0 0
  %593 = vmatmul.mubr.bf16.gmra.mrb[0].mxu0 %v447
  %v594 = vpop.f32.mrb[0].mxu0
  %v595 = vadd.f32 %v479, %v594
  %v596 = vpop.f32.mrb[0].mxu0
  %v597 = vpop.f32.mrb[0].mxu0
  %v598 = vadd.f32 %v479, %v597
  %v599 = vpop.f32.mrb[0].mxu0
  %600 = vmatprep.mubr.bf16.mxu0 0
  %601 = vmatmul.mubr.bf16.gmra.mrb[0].mxu0 %v448
  %v602 = vpop.f32.mrb[0].mxu0
  %v603 = vadd.f32 %v479, %v602
  %v604 = vpop.f32.mrb[0].mxu0
  %v605 = vpop.f32.mrb[0].mxu0
  %v606 = vadd.f32 %v479, %v605
  %v607 = vpop.f32.mrb[0].mxu0
  %608 = vmatprep.mubr.bf16.mxu0 0
  %609 = vmatmul.mubr.bf16.gmra.mrb[0].mxu0 %v449
  %v610 = vpop.f32.mrb[0].mxu0
  %v611 = vadd.f32 %v479, %v610
  %v612 = vpop.f32.mrb[0].mxu0
  %v613 = vpop.f32.mrb[0].mxu0
  %v614 = vadd.f32 %v479, %v613
  %v615 = vpop.f32.mrb[0].mxu0
  %616 = vmatprep.mubr.bf16.mxu0 0
  %617 = vmatmul.mubr.bf16.gmra.mrb[0].mxu0 %v450
  %v618 = vpop.f32.mrb[0].mxu0
  %v619 = vadd.f32 %v479, %v618
  %v620 = vpop.f32.mrb[0].mxu0
  %v621 = vpop.f32.mrb[0].mxu0
  %v622 = vadd.f32 %v479, %v621
  %v623 = vpop.f32.mrb[0].mxu0
  %624 = vdwg.mxu0
  %625 = vmatprep.subr.bf16.mxu0 0
  %626 = vmatpush1.bf16.msra.mxu0 %v512
  %627 = vmatprep.subr.bf16.mxu0 0
  %628 = vmatpush1.bf16.msra.mxu0 %v513
  %629 = vmatprep.subr.bf16.mxu0 0
  %630 = vmatpush1.bf16.msra.mxu0 %v514
  %631 = vmatprep.subr.bf16.mxu0 0
  %632 = vmatpush1.bf16.msra.mxu0 %v515
  %633 = vmatprep.subr.bf16.mxu0 0
  %634 = vmatpush1.bf16.msra.mxu0 %v516
  %635 = vmatprep.subr.bf16.mxu0 0
  %636 = vmatpush1.bf16.msra.mxu0 %v517
  %637 = vmatprep.subr.bf16.mxu0 0
  %638 = vmatpush1.bf16.msra.mxu0 %v518
  %639 = vmatprep.subr.bf16.mxu0 0
  %640 = vmatpush1.bf16.msra.mxu0 %v519
  %641 = vmatprep.subr.bf16.mxu0 0
  %642 = vmatpush1.bf16.msra.mxu0 0
  %643 = vmatprep.subr.bf16.mxu0 0
  %644 = vmatpush1.bf16.msra.mxu0 0
  %645 = vmatprep.subr.bf16.mxu0 0
  %646 = vmatpush1.bf16.msra.mxu0 0
  %647 = vmatprep.subr.bf16.mxu0 0
  %648 = vmatpush1.bf16.msra.mxu0 0
  %649 = vmatprep.subr.bf16.mxu0 0
  %650 = vmatpush1.bf16.msra.mxu0 0
  %651 = vmatprep.subr.bf16.mxu0 0
  %652 = vmatpush1.bf16.msra.mxu0 0
  %653 = vmatprep.subr.bf16.mxu0 0
  %654 = vmatpush1.bf16.msra.mxu0 0
  %655 = vmatprep.subr.bf16.mxu0 0
  %656 = vmatpush1.bf16.msra.mxu0 0
  %657 = vmatprep.mubr.bf16.mxu0 0
  %658 = vmatmul.mubr.bf16.gmra.mrb[0].mxu0 %v451
  %v659 = vpop.f32.mrb[0].mxu0
  %v660 = vadd.f32 %v479, %v659
  %v661 = vpop.f32.mrb[0].mxu0
  %v662 = vpop.f32.mrb[0].mxu0
  %v663 = vadd.f32 %v479, %v662
  %v664 = vpop.f32.mrb[0].mxu0
  %665 = vmatprep.mubr.bf16.mxu0 0
  %666 = vmatmul.mubr.bf16.gmra.mrb[0].mxu0 %v452
  %v667 = vpop.f32.mrb[0].mxu0
  %v668 = vadd.f32 %v479, %v667
  %v669 = vpop.f32.mrb[0].mxu0
  %v670 = vpop.f32.mrb[0].mxu0
  %v671 = vadd.f32 %v479, %v670
  %v672 = vpop.f32.mrb[0].mxu0
  %673 = vmatprep.mubr.bf16.mxu0 0
  %674 = vmatmul.mubr.bf16.gmra.mrb[0].mxu0 %v453
  %v675 = vpop.f32.mrb[0].mxu0
  %v676 = vadd.f32 %v479, %v675
  %v677 = vpop.f32.mrb[0].mxu0
  %v678 = vpop.f32.mrb[0].mxu0
  %v679 = vadd.f32 %v479, %v678
  %v680 = vpop.f32.mrb[0].mxu0
  %681 = vmatprep.mubr.bf16.mxu0 0
  %682 = vmatmul.mubr.bf16.gmra.mrb[0].mxu0 %v454
  %v683 = vpop.f32.mrb[0].mxu0
  %v684 = vadd.f32 %v479, %v683
  %v685 = vpop.f32.mrb[0].mxu0
  %v686 = vpop.f32.mrb[0].mxu0
  %v687 = vadd.f32 %v479, %v686
  %v688 = vpop.f32.mrb[0].mxu0
  %689 = vmatprep.mubr.bf16.mxu0 0
  %690 = vmatmul.mubr.bf16.gmra.mrb[0].mxu0 %v455
  %v691 = vpop.f32.mrb[0].mxu0
  %v692 = vadd.f32 %v479, %v691
  %v693 = vpop.f32.mrb[0].mxu0
  %v694 = vpop.f32.mrb[0].mxu0
  %v695 = vadd.f32 %v479, %v694
  %v696 = vpop.f32.mrb[0].mxu0
  %697 = vmatprep.mubr.bf16.mxu0 0
  %698 = vmatmul.mubr.bf16.gmra.mrb[0].mxu0 %v456
  %v699 = vpop.f32.mrb[0].mxu0
  %v700 = vadd.f32 %v479, %v699
  %v701 = vpop.f32.mrb[0].mxu0
  %v702 = vpop.f32.mrb[0].mxu0
  %v703 = vadd.f32 %v479, %v702
  %v704 = vpop.f32.mrb[0].mxu0
  %705 = vmatprep.mubr.bf16.mxu0 0
  %706 = vmatmul.mubr.bf16.gmra.mrb[0].mxu0 %v457
  %v707 = vpop.f32.mrb[0].mxu0
  %v708 = vadd.f32 %v479, %v707
  %v709 = vpop.f32.mrb[0].mxu0
  %v710 = vpop.f32.mrb[0].mxu0
  %v711 = vadd.f32 %v479, %v710
  %v712 = vpop.f32.mrb[0].mxu0
  %713 = vmatprep.mubr.bf16.mxu0 0
  %714 = vmatmul.mubr.bf16.gmra.mrb[0].mxu0 %v458
  %v715 = vpop.f32.mrb[0].mxu0
  %v716 = vadd.f32 %v479, %v715
  %v717 = vpop.f32.mrb[0].mxu0
  %v718 = vpop.f32.mrb[0].mxu0
  %v719 = vadd.f32 %v479, %v718
  %v720 = vpop.f32.mrb[0].mxu0
  %721 = vdwg.mxu0
  %v722 = vtanh.pop %v563
  %v723 = vtanh.pop %v566
  %v724 = vtanh.pop %v571
  %v725 = vtanh.pop %v574
  %v726 = vtanh.pop %v579
  %v727 = vtanh.pop %v582
  %v728 = vtanh.pop %v587
  %v729 = vtanh.pop %v590
  %v730 = vtanh.pop %v595
  %v731 = vtanh.pop %v598
  %v732 = vtanh.pop %v603
  %v733 = vtanh.pop %v606
  %v734 = vtanh.pop %v611
  %v735 = vtanh.pop %v614
  %v736 = vtanh.pop %v619
  %v737 = vtanh.pop %v622
  %v738 = vtanh.pop %v660
  %v739 = vtanh.pop %v663
  %v740 = vtanh.pop %v668
  %v741 = vtanh.pop %v671
  %v742 = vtanh.pop %v676
  %v743 = vtanh.pop %v679
  %v744 = vtanh.pop %v684
  %v745 = vtanh.pop %v687
  %v746 = vtanh.pop %v692
  %v747 = vtanh.pop %v695
  %v748 = vtanh.pop %v700
  %v749 = vtanh.pop %v703
  %v750 = vtanh.pop %v708
  %v751 = vtanh.pop %v711
  %v752 = vtanh.pop %v716
  %v753 = vtanh.pop %v719
  %v754 = vpack.c.bf16 %v723, %v722
  %v755 = vpack.c.bf16 %v725, %v724
  %v756 = vpack.c.bf16 %v727, %v726
  %v757 = vpack.c.bf16 %v729, %v728
  %v758 = vpack.c.bf16 %v731, %v730
  %v759 = vpack.c.bf16 %v733, %v732
  %v760 = vpack.c.bf16 %v735, %v734
  %v761 = vpack.c.bf16 %v737, %v736
  %v762 = vpack.c.bf16 %v739, %v738
  %v763 = vpack.c.bf16 %v741, %v740
  %v764 = vpack.c.bf16 %v743, %v742
  %v765 = vpack.c.bf16 %v745, %v744
  %v766 = vpack.c.bf16 %v747, %v746
  %v767 = vpack.c.bf16 %v749, %v748
  %v768 = vpack.c.bf16 %v751, %v750
  %v769 = vpack.c.bf16 %v753, %v752
  %v770 = vld [vmem:[%s2 + $0x80] sm:$0xf]
  %v771 = vld [vmem:[%s2 + $0x84] sm:$0xf]
  %v772 = vld [vmem:[%s2 + $0x88] sm:$0xf]
  %v773 = vld [vmem:[%s2 + $0x8c] sm:$0xf]
  %v774 = vld [vmem:[%s2 + $0x90] sm:$0xf]
  %v775 = vld [vmem:[%s2 + $0x94] sm:$0xf]
  %v776 = vld [vmem:[%s2 + $0x98] sm:$0xf]
  %v777 = vld [vmem:[%s2 + $0x9c] sm:$0xf]
  %v778 = vld [vmem:[%s2 + $0xa0] sm:$0xf]
  %v779 = vld [vmem:[%s2 + $0xa4] sm:$0xf]
  %v780 = vld [vmem:[%s2 + $0xa8] sm:$0xf]
  %v781 = vld [vmem:[%s2 + $0xac] sm:$0xf]
  %v782 = vld [vmem:[%s2 + $0xb0] sm:$0xf]
  %v783 = vld [vmem:[%s2 + $0xb4] sm:$0xf]
  %v784 = vld [vmem:[%s2 + $0xb8] sm:$0xf]
  %v785 = vld [vmem:[%s2 + $0xbc] sm:$0xf]
  %v786 = vld [vmem:[%s3 + $0x10] sm:$0xff]
  %v787 = vlaneseq
  %v788 = vshrl.u32 %v787, 7
  %v789 = vsub.s32 0, %v788
  %v790 = vrot.slane %v786, %v789
  %v807 = vunpack.c.l.b16 %v770
  %v808 = vunpack.c.l.b16 %v771
  %v809 = vunpack.c.l.b16 %v772
  %v810 = vunpack.c.l.b16 %v773
  %v811 = vunpack.c.l.b16 %v774
  %v812 = vunpack.c.l.b16 %v775
  %v813 = vunpack.c.l.b16 %v776
  %v814 = vunpack.c.l.b16 %v777
  %v815 = vunpack.c.l.b16 %v778
  %v816 = vunpack.c.l.b16 %v779
  %v817 = vunpack.c.l.b16 %v780
  %v818 = vunpack.c.l.b16 %v781
  %v819 = vunpack.c.l.b16 %v782
  %v820 = vunpack.c.l.b16 %v783
  %v821 = vunpack.c.l.b16 %v784
  %v822 = vunpack.c.l.b16 %v785
  %v823 = vpack.c.b16 %v808, %v807
  %v824 = vpack.c.b16 %v810, %v809
  %v825 = vpack.c.b16 %v812, %v811
  %v826 = vpack.c.b16 %v814, %v813
  %v827 = vpack.c.b16 %v816, %v815
  %v828 = vpack.c.b16 %v818, %v817
  %v829 = vpack.c.b16 %v820, %v819
  %v830 = vpack.c.b16 %v822, %v821
  %839 = vmatprep.subr.bf16.mxu0 0
  %840 = vmatpush1.bf16.msra.mxu0 %v823
  %841 = vmatprep.subr.bf16.mxu0 0
  %842 = vmatpush1.bf16.msra.mxu0 %v824
  %843 = vmatprep.subr.bf16.mxu0 0
  %844 = vmatpush1.bf16.msra.mxu0 %v825
  %845 = vmatprep.subr.bf16.mxu0 0
  %846 = vmatpush1.bf16.msra.mxu0 %v826
  %847 = vmatprep.subr.bf16.mxu0 0
  %848 = vmatpush1.bf16.msra.mxu0 %v827
  %849 = vmatprep.subr.bf16.mxu0 0
  %850 = vmatpush1.bf16.msra.mxu0 %v828
  %851 = vmatprep.subr.bf16.mxu0 0
  %852 = vmatpush1.bf16.msra.mxu0 %v829
  %853 = vmatprep.subr.bf16.mxu0 0
  %854 = vmatpush1.bf16.msra.mxu0 %v830
  %855 = vmatprep.subr.bf16.mxu0 0
  %856 = vmatpush1.bf16.msra.mxu0 0
  %857 = vmatprep.subr.bf16.mxu0 0
  %858 = vmatpush1.bf16.msra.mxu0 0
  %859 = vmatprep.subr.bf16.mxu0 0
  %860 = vmatpush1.bf16.msra.mxu0 0
  %861 = vmatprep.subr.bf16.mxu0 0
  %862 = vmatpush1.bf16.msra.mxu0 0
  %863 = vmatprep.subr.bf16.mxu0 0
  %864 = vmatpush1.bf16.msra.mxu0 0
  %865 = vmatprep.subr.bf16.mxu0 0
  %866 = vmatpush1.bf16.msra.mxu0 0
  %867 = vmatprep.subr.bf16.mxu0 0
  %868 = vmatpush1.bf16.msra.mxu0 0
  %869 = vmatprep.subr.bf16.mxu0 0
  %870 = vmatpush1.bf16.msra.mxu0 0
  %871 = vmatprep.mubr.bf16.mxu0 0
  %872 = vmatmul.mubr.bf16.gmra.mrb[0].mxu0 %v754
  %v873 = vpop.f32.mrb[0].mxu0
  %v874 = vadd.f32 %v790, %v873
  %v875 = vpop.f32.mrb[0].mxu0
  %v876 = vpop.f32.mrb[0].mxu0
  %v877 = vadd.f32 %v790, %v876
  %v878 = vpop.f32.mrb[0].mxu0
  %879 = vmatprep.mubr.bf16.mxu0 0
  %880 = vmatmul.mubr.bf16.gmra.mrb[0].mxu0 %v755
  %v881 = vpop.f32.mrb[0].mxu0
  %v882 = vadd.f32 %v790, %v881
  %v883 = vpop.f32.mrb[0].mxu0
  %v884 = vpop.f32.mrb[0].mxu0
  %v885 = vadd.f32 %v790, %v884
  %v886 = vpop.f32.mrb[0].mxu0
  %887 = vmatprep.mubr.bf16.mxu0 0
  %888 = vmatmul.mubr.bf16.gmra.mrb[0].mxu0 %v756
  %v889 = vpop.f32.mrb[0].mxu0
  %v890 = vadd.f32 %v790, %v889
  %v891 = vpop.f32.mrb[0].mxu0
  %v892 = vpop.f32.mrb[0].mxu0
  %v893 = vadd.f32 %v790, %v892
  %v894 = vpop.f32.mrb[0].mxu0
  %895 = vmatprep.mubr.bf16.mxu0 0
  %896 = vmatmul.mubr.bf16.gmra.mrb[0].mxu0 %v757
  %v897 = vpop.f32.mrb[0].mxu0
  %v898 = vadd.f32 %v790, %v897
  %v899 = vpop.f32.mrb[0].mxu0
  %v900 = vpop.f32.mrb[0].mxu0
  %v901 = vadd.f32 %v790, %v900
  %v902 = vpop.f32.mrb[0].mxu0
  %903 = vmatprep.mubr.bf16.mxu0 0
  %904 = vmatmul.mubr.bf16.gmra.mrb[0].mxu0 %v758
  %v905 = vpop.f32.mrb[0].mxu0
  %v906 = vadd.f32 %v790, %v905
  %v907 = vpop.f32.mrb[0].mxu0
  %v908 = vpop.f32.mrb[0].mxu0
  %v909 = vadd.f32 %v790, %v908
  %v910 = vpop.f32.mrb[0].mxu0
  %911 = vmatprep.mubr.bf16.mxu0 0
  %912 = vmatmul.mubr.bf16.gmra.mrb[0].mxu0 %v759
  %v913 = vpop.f32.mrb[0].mxu0
  %v914 = vadd.f32 %v790, %v913
  %v915 = vpop.f32.mrb[0].mxu0
  %v916 = vpop.f32.mrb[0].mxu0
  %v917 = vadd.f32 %v790, %v916
  %v918 = vpop.f32.mrb[0].mxu0
  %919 = vmatprep.mubr.bf16.mxu0 0
  %920 = vmatmul.mubr.bf16.gmra.mrb[0].mxu0 %v760
  %v921 = vpop.f32.mrb[0].mxu0
  %v922 = vadd.f32 %v790, %v921
  %v923 = vpop.f32.mrb[0].mxu0
  %v924 = vpop.f32.mrb[0].mxu0
  %v925 = vadd.f32 %v790, %v924
  %v926 = vpop.f32.mrb[0].mxu0
  %927 = vmatprep.mubr.bf16.mxu0 0
  %928 = vmatmul.mubr.bf16.gmra.mrb[0].mxu0 %v761
  %v929 = vpop.f32.mrb[0].mxu0
  %v930 = vadd.f32 %v790, %v929
  %v931 = vpop.f32.mrb[0].mxu0
  %v932 = vpop.f32.mrb[0].mxu0
  %v933 = vadd.f32 %v790, %v932
  %v934 = vpop.f32.mrb[0].mxu0
  %935 = vdwg.mxu0
  %936 = vmatprep.subr.bf16.mxu0 0
  %937 = vmatpush1.bf16.msra.mxu0 %v823
  %938 = vmatprep.subr.bf16.mxu0 0
  %939 = vmatpush1.bf16.msra.mxu0 %v824
  %940 = vmatprep.subr.bf16.mxu0 0
  %941 = vmatpush1.bf16.msra.mxu0 %v825
  %942 = vmatprep.subr.bf16.mxu0 0
  %943 = vmatpush1.bf16.msra.mxu0 %v826
  %944 = vmatprep.subr.bf16.mxu0 0
  %945 = vmatpush1.bf16.msra.mxu0 %v827
  %946 = vmatprep.subr.bf16.mxu0 0
  %947 = vmatpush1.bf16.msra.mxu0 %v828
  %948 = vmatprep.subr.bf16.mxu0 0
  %949 = vmatpush1.bf16.msra.mxu0 %v829
  %950 = vmatprep.subr.bf16.mxu0 0
  %951 = vmatpush1.bf16.msra.mxu0 %v830
  %952 = vmatprep.subr.bf16.mxu0 0
  %953 = vmatpush1.bf16.msra.mxu0 0
  %954 = vmatprep.subr.bf16.mxu0 0
  %955 = vmatpush1.bf16.msra.mxu0 0
  %956 = vmatprep.subr.bf16.mxu0 0
  %957 = vmatpush1.bf16.msra.mxu0 0
  %958 = vmatprep.subr.bf16.mxu0 0
  %959 = vmatpush1.bf16.msra.mxu0 0
  %960 = vmatprep.subr.bf16.mxu0 0
  %961 = vmatpush1.bf16.msra.mxu0 0
  %962 = vmatprep.subr.bf16.mxu0 0
  %963 = vmatpush1.bf16.msra.mxu0 0
  %964 = vmatprep.subr.bf16.mxu0 0
  %965 = vmatpush1.bf16.msra.mxu0 0
  %966 = vmatprep.subr.bf16.mxu0 0
  %967 = vmatpush1.bf16.msra.mxu0 0
  %968 = vmatprep.mubr.bf16.mxu0 0
  %969 = vmatmul.mubr.bf16.gmra.mrb[0].mxu0 %v762
  %v970 = vpop.f32.mrb[0].mxu0
  %v971 = vadd.f32 %v790, %v970
  %v972 = vpop.f32.mrb[0].mxu0
  %v973 = vpop.f32.mrb[0].mxu0
  %v974 = vadd.f32 %v790, %v973
  %v975 = vpop.f32.mrb[0].mxu0
  %976 = vmatprep.mubr.bf16.mxu0 0
  %977 = vmatmul.mubr.bf16.gmra.mrb[0].mxu0 %v763
  %v978 = vpop.f32.mrb[0].mxu0
  %v979 = vadd.f32 %v790, %v978
  %v980 = vpop.f32.mrb[0].mxu0
  %v981 = vpop.f32.mrb[0].mxu0
  %v982 = vadd.f32 %v790, %v981
  %v983 = vpop.f32.mrb[0].mxu0
  %984 = vmatprep.mubr.bf16.mxu0 0
  %985 = vmatmul.mubr.bf16.gmra.mrb[0].mxu0 %v764
  %v986 = vpop.f32.mrb[0].mxu0
  %v987 = vadd.f32 %v790, %v986
  %v988 = vpop.f32.mrb[0].mxu0
  %v989 = vpop.f32.mrb[0].mxu0
  %v990 = vadd.f32 %v790, %v989
  %v991 = vpop.f32.mrb[0].mxu0
  %992 = vmatprep.mubr.bf16.mxu0 0
  %993 = vmatmul.mubr.bf16.gmra.mrb[0].mxu0 %v765
  %v994 = vpop.f32.mrb[0].mxu0
  %v995 = vadd.f32 %v790, %v994
  %v996 = vpop.f32.mrb[0].mxu0
  %v997 = vpop.f32.mrb[0].mxu0
  %v998 = vadd.f32 %v790, %v997
  %v999 = vpop.f32.mrb[0].mxu0
  %1000 = vmatprep.mubr.bf16.mxu0 0
  %1001 = vmatmul.mubr.bf16.gmra.mrb[0].mxu0 %v766
  %v1002 = vpop.f32.mrb[0].mxu0
  %v1003 = vadd.f32 %v790, %v1002
  %v1004 = vpop.f32.mrb[0].mxu0
  %v1005 = vpop.f32.mrb[0].mxu0
  %v1006 = vadd.f32 %v790, %v1005
  %v1007 = vpop.f32.mrb[0].mxu0
  %1008 = vmatprep.mubr.bf16.mxu0 0
  %1009 = vmatmul.mubr.bf16.gmra.mrb[0].mxu0 %v767
  %v1010 = vpop.f32.mrb[0].mxu0
  %v1011 = vadd.f32 %v790, %v1010
  %v1012 = vpop.f32.mrb[0].mxu0
  %v1013 = vpop.f32.mrb[0].mxu0
  %v1014 = vadd.f32 %v790, %v1013
  %v1015 = vpop.f32.mrb[0].mxu0
  %1016 = vmatprep.mubr.bf16.mxu0 0
  %1017 = vmatmul.mubr.bf16.gmra.mrb[0].mxu0 %v768
  %v1018 = vpop.f32.mrb[0].mxu0
  %v1019 = vadd.f32 %v790, %v1018
  %v1020 = vpop.f32.mrb[0].mxu0
  %v1021 = vpop.f32.mrb[0].mxu0
  %v1022 = vadd.f32 %v790, %v1021
  %v1023 = vpop.f32.mrb[0].mxu0
  %1024 = vmatprep.mubr.bf16.mxu0 0
  %1025 = vmatmul.mubr.bf16.gmra.mrb[0].mxu0 %v769
  %v1026 = vpop.f32.mrb[0].mxu0
  %v1027 = vadd.f32 %v790, %v1026
  %v1028 = vpop.f32.mrb[0].mxu0
  %v1029 = vpop.f32.mrb[0].mxu0
  %v1030 = vadd.f32 %v790, %v1029
  %v1031 = vpop.f32.mrb[0].mxu0
  %1032 = vdwg.mxu0
  %v1033 = vpack.c.bf16 %v877, %v874
  %v1034 = vpack.c.bf16 %v885, %v882
  %v1035 = vpack.c.bf16 %v893, %v890
  %v1036 = vpack.c.bf16 %v901, %v898
  %v1037 = vpack.c.bf16 %v909, %v906
  %v1038 = vpack.c.bf16 %v917, %v914
  %v1039 = vpack.c.bf16 %v925, %v922
  %v1040 = vpack.c.bf16 %v933, %v930
  %v1041 = vpack.c.bf16 %v974, %v971
  %v1042 = vpack.c.bf16 %v982, %v979
  %v1043 = vpack.c.bf16 %v990, %v987
  %v1044 = vpack.c.bf16 %v998, %v995
  %v1045 = vpack.c.bf16 %v1006, %v1003
  %v1046 = vpack.c.bf16 %v1014, %v1011
  %v1047 = vpack.c.bf16 %v1022, %v1019
  %v1048 = vpack.c.bf16 %v1030, %v1027
  %v1049 = vld [vmem:[%s2 + $0xc0] sm:$0xf]
  %v1050 = vld [vmem:[%s2 + $0xc4] sm:$0xf]
  %v1051 = vld [vmem:[%s2 + $0xc8] sm:$0xf]
  %v1052 = vld [vmem:[%s2 + $0xcc] sm:$0xf]
  %v1053 = vld [vmem:[%s2 + $0xd0] sm:$0xf]
  %v1054 = vld [vmem:[%s2 + $0xd4] sm:$0xf]
  %v1055 = vld [vmem:[%s2 + $0xd8] sm:$0xf]
  %v1056 = vld [vmem:[%s2 + $0xdc] sm:$0xf]
  %v1057 = vld [vmem:[%s2 + $0xe0] sm:$0xf]
  %v1058 = vld [vmem:[%s2 + $0xe4] sm:$0xf]
  %v1059 = vld [vmem:[%s2 + $0xe8] sm:$0xf]
  %v1060 = vld [vmem:[%s2 + $0xec] sm:$0xf]
  %v1061 = vld [vmem:[%s2 + $0xf0] sm:$0xf]
  %v1062 = vld [vmem:[%s2 + $0xf4] sm:$0xf]
  %v1063 = vld [vmem:[%s2 + $0xf8] sm:$0xf]
  %v1064 = vld [vmem:[%s2 + $0xfc] sm:$0xf]
  %v1065 = vld [vmem:[%s3 + $0x18] sm:$0xff]
  %v1066 = vlaneseq
  %v1067 = vshrl.u32 %v1066, 7
  %v1068 = vsub.s32 0, %v1067
  %v1069 = vrot.slane %v1065, %v1068
  %v1086 = vunpack.c.l.b16 %v1049
  %v1087 = vunpack.c.l.b16 %v1050
  %v1088 = vunpack.c.l.b16 %v1051
  %v1089 = vunpack.c.l.b16 %v1052
  %v1090 = vunpack.c.l.b16 %v1053
  %v1091 = vunpack.c.l.b16 %v1054
  %v1092 = vunpack.c.l.b16 %v1055
  %v1093 = vunpack.c.l.b16 %v1056
  %v1094 = vunpack.c.l.b16 %v1057
  %v1095 = vunpack.c.l.b16 %v1058
  %v1096 = vunpack.c.l.b16 %v1059
  %v1097 = vunpack.c.l.b16 %v1060
  %v1098 = vunpack.c.l.b16 %v1061
  %v1099 = vunpack.c.l.b16 %v1062
  %v1100 = vunpack.c.l.b16 %v1063
  %v1101 = vunpack.c.l.b16 %v1064
  %v1102 = vpack.c.b16 %v1087, %v1086
  %v1103 = vpack.c.b16 %v1089, %v1088
  %v1104 = vpack.c.b16 %v1091, %v1090
  %v1105 = vpack.c.b16 %v1093, %v1092
  %v1106 = vpack.c.b16 %v1095, %v1094
  %v1107 = vpack.c.b16 %v1097, %v1096
  %v1108 = vpack.c.b16 %v1099, %v1098
  %v1109 = vpack.c.b16 %v1101, %v1100
  %1118 = vmatprep.subr.bf16.mxu0 0
  %1119 = vmatpush1.bf16.msra.mxu0 %v1102
  %1120 = vmatprep.subr.bf16.mxu0 0
  %1121 = vmatpush1.bf16.msra.mxu0 %v1103
  %1122 = vmatprep.subr.bf16.mxu0 0
  %1123 = vmatpush1.bf16.msra.mxu0 %v1104
  %1124 = vmatprep.subr.bf16.mxu0 0
  %1125 = vmatpush1.bf16.msra.mxu0 %v1105
  %1126 = vmatprep.subr.bf16.mxu0 0
  %1127 = vmatpush1.bf16.msra.mxu0 %v1106
  %1128 = vmatprep.subr.bf16.mxu0 0
  %1129 = vmatpush1.bf16.msra.mxu0 %v1107
  %1130 = vmatprep.subr.bf16.mxu0 0
  %1131 = vmatpush1.bf16.msra.mxu0 %v1108
  %1132 = vmatprep.subr.bf16.mxu0 0
  %1133 = vmatpush1.bf16.msra.mxu0 %v1109
  %1134 = vmatprep.subr.bf16.mxu0 0
  %1135 = vmatpush1.bf16.msra.mxu0 0
  %1136 = vmatprep.subr.bf16.mxu0 0
  %1137 = vmatpush1.bf16.msra.mxu0 0
  %1138 = vmatprep.subr.bf16.mxu0 0
  %1139 = vmatpush1.bf16.msra.mxu0 0
  %1140 = vmatprep.subr.bf16.mxu0 0
  %1141 = vmatpush1.bf16.msra.mxu0 0
  %1142 = vmatprep.subr.bf16.mxu0 0
  %1143 = vmatpush1.bf16.msra.mxu0 0
  %1144 = vmatprep.subr.bf16.mxu0 0
  %1145 = vmatpush1.bf16.msra.mxu0 0
  %1146 = vmatprep.subr.bf16.mxu0 0
  %1147 = vmatpush1.bf16.msra.mxu0 0
  %1148 = vmatprep.subr.bf16.mxu0 0
  %1149 = vmatpush1.bf16.msra.mxu0 0
  %1150 = vmatprep.mubr.bf16.mxu0 0
  %1151 = vmatmul.mubr.bf16.gmra.mrb[0].mxu0 %v1033
  %v1152 = vpop.f32.mrb[0].mxu0
  %v1153 = vadd.f32 %v1069, %v1152
  %v1154 = vpop.f32.mrb[0].mxu0
  %v1155 = vpop.f32.mrb[0].mxu0
  %v1156 = vadd.f32 %v1069, %v1155
  %v1157 = vpop.f32.mrb[0].mxu0
  %1158 = vmatprep.mubr.bf16.mxu0 0
  %1159 = vmatmul.mubr.bf16.gmra.mrb[0].mxu0 %v1034
  %v1160 = vpop.f32.mrb[0].mxu0
  %v1161 = vadd.f32 %v1069, %v1160
  %v1162 = vpop.f32.mrb[0].mxu0
  %v1163 = vpop.f32.mrb[0].mxu0
  %v1164 = vadd.f32 %v1069, %v1163
  %v1165 = vpop.f32.mrb[0].mxu0
  %1166 = vmatprep.mubr.bf16.mxu0 0
  %1167 = vmatmul.mubr.bf16.gmra.mrb[0].mxu0 %v1035
  %v1168 = vpop.f32.mrb[0].mxu0
  %v1169 = vadd.f32 %v1069, %v1168
  %v1170 = vpop.f32.mrb[0].mxu0
  %v1171 = vpop.f32.mrb[0].mxu0
  %v1172 = vadd.f32 %v1069, %v1171
  %v1173 = vpop.f32.mrb[0].mxu0
  %1174 = vmatprep.mubr.bf16.mxu0 0
  %1175 = vmatmul.mubr.bf16.gmra.mrb[0].mxu0 %v1036
  %v1176 = vpop.f32.mrb[0].mxu0
  %v1177 = vadd.f32 %v1069, %v1176
  %v1178 = vpop.f32.mrb[0].mxu0
  %v1179 = vpop.f32.mrb[0].mxu0
  %v1180 = vadd.f32 %v1069, %v1179
  %v1181 = vpop.f32.mrb[0].mxu0
  %1182 = vmatprep.mubr.bf16.mxu0 0
  %1183 = vmatmul.mubr.bf16.gmra.mrb[0].mxu0 %v1037
  %v1184 = vpop.f32.mrb[0].mxu0
  %v1185 = vadd.f32 %v1069, %v1184
  %v1186 = vpop.f32.mrb[0].mxu0
  %v1187 = vpop.f32.mrb[0].mxu0
  %v1188 = vadd.f32 %v1069, %v1187
  %v1189 = vpop.f32.mrb[0].mxu0
  %1190 = vmatprep.mubr.bf16.mxu0 0
  %1191 = vmatmul.mubr.bf16.gmra.mrb[0].mxu0 %v1038
  %v1192 = vpop.f32.mrb[0].mxu0
  %v1193 = vadd.f32 %v1069, %v1192
  %v1194 = vpop.f32.mrb[0].mxu0
  %v1195 = vpop.f32.mrb[0].mxu0
  %v1196 = vadd.f32 %v1069, %v1195
  %v1197 = vpop.f32.mrb[0].mxu0
  %1198 = vmatprep.mubr.bf16.mxu0 0
  %1199 = vmatmul.mubr.bf16.gmra.mrb[0].mxu0 %v1039
  %v1200 = vpop.f32.mrb[0].mxu0
  %v1201 = vadd.f32 %v1069, %v1200
  %v1202 = vpop.f32.mrb[0].mxu0
  %v1203 = vpop.f32.mrb[0].mxu0
  %v1204 = vadd.f32 %v1069, %v1203
  %v1205 = vpop.f32.mrb[0].mxu0
  %1206 = vmatprep.mubr.bf16.mxu0 0
  %1207 = vmatmul.mubr.bf16.gmra.mrb[0].mxu0 %v1040
  %v1208 = vpop.f32.mrb[0].mxu0
  %v1209 = vadd.f32 %v1069, %v1208
  %v1210 = vpop.f32.mrb[0].mxu0
  %v1211 = vpop.f32.mrb[0].mxu0
  %v1212 = vadd.f32 %v1069, %v1211
  %v1213 = vpop.f32.mrb[0].mxu0
  %1214 = vdwg.mxu0
  %1215 = vmatprep.subr.bf16.mxu0 0
  %1216 = vmatpush1.bf16.msra.mxu0 %v1102
  %1217 = vmatprep.subr.bf16.mxu0 0
  %1218 = vmatpush1.bf16.msra.mxu0 %v1103
  %1219 = vmatprep.subr.bf16.mxu0 0
  %1220 = vmatpush1.bf16.msra.mxu0 %v1104
  %1221 = vmatprep.subr.bf16.mxu0 0
  %1222 = vmatpush1.bf16.msra.mxu0 %v1105
  %1223 = vmatprep.subr.bf16.mxu0 0
  %1224 = vmatpush1.bf16.msra.mxu0 %v1106
  %1225 = vmatprep.subr.bf16.mxu0 0
  %1226 = vmatpush1.bf16.msra.mxu0 %v1107
  %1227 = vmatprep.subr.bf16.mxu0 0
  %1228 = vmatpush1.bf16.msra.mxu0 %v1108
  %1229 = vmatprep.subr.bf16.mxu0 0
  %1230 = vmatpush1.bf16.msra.mxu0 %v1109
  %1231 = vmatprep.subr.bf16.mxu0 0
  %1232 = vmatpush1.bf16.msra.mxu0 0
  %1233 = vmatprep.subr.bf16.mxu0 0
  %1234 = vmatpush1.bf16.msra.mxu0 0
  %1235 = vmatprep.subr.bf16.mxu0 0
  %1236 = vmatpush1.bf16.msra.mxu0 0
  %1237 = vmatprep.subr.bf16.mxu0 0
  %1238 = vmatpush1.bf16.msra.mxu0 0
  %1239 = vmatprep.subr.bf16.mxu0 0
  %1240 = vmatpush1.bf16.msra.mxu0 0
  %1241 = vmatprep.subr.bf16.mxu0 0
  %1242 = vmatpush1.bf16.msra.mxu0 0
  %1243 = vmatprep.subr.bf16.mxu0 0
  %1244 = vmatpush1.bf16.msra.mxu0 0
  %1245 = vmatprep.subr.bf16.mxu0 0
  %1246 = vmatpush1.bf16.msra.mxu0 0
  %1247 = vmatprep.mubr.bf16.mxu0 0
  %1248 = vmatmul.mubr.bf16.gmra.mrb[0].mxu0 %v1041
  %v1249 = vpop.f32.mrb[0].mxu0
  %v1250 = vadd.f32 %v1069, %v1249
  %v1251 = vpop.f32.mrb[0].mxu0
  %v1252 = vpop.f32.mrb[0].mxu0
  %v1253 = vadd.f32 %v1069, %v1252
  %v1254 = vpop.f32.mrb[0].mxu0
  %1255 = vmatprep.mubr.bf16.mxu0 0
  %1256 = vmatmul.mubr.bf16.gmra.mrb[0].mxu0 %v1042
  %v1257 = vpop.f32.mrb[0].mxu0
  %v1258 = vadd.f32 %v1069, %v1257
  %v1259 = vpop.f32.mrb[0].mxu0
  %v1260 = vpop.f32.mrb[0].mxu0
  %v1261 = vadd.f32 %v1069, %v1260
  %v1262 = vpop.f32.mrb[0].mxu0
  %1263 = vmatprep.mubr.bf16.mxu0 0
  %1264 = vmatmul.mubr.bf16.gmra.mrb[0].mxu0 %v1043
  %v1265 = vpop.f32.mrb[0].mxu0
  %v1266 = vadd.f32 %v1069, %v1265
  %v1267 = vpop.f32.mrb[0].mxu0
  %v1268 = vpop.f32.mrb[0].mxu0
  %v1269 = vadd.f32 %v1069, %v1268
  %v1270 = vpop.f32.mrb[0].mxu0
  %1271 = vmatprep.mubr.bf16.mxu0 0
  %1272 = vmatmul.mubr.bf16.gmra.mrb[0].mxu0 %v1044
  %v1273 = vpop.f32.mrb[0].mxu0
  %v1274 = vadd.f32 %v1069, %v1273
  %v1275 = vpop.f32.mrb[0].mxu0
  %v1276 = vpop.f32.mrb[0].mxu0
  %v1277 = vadd.f32 %v1069, %v1276
  %v1278 = vpop.f32.mrb[0].mxu0
  %1279 = vmatprep.mubr.bf16.mxu0 0
  %1280 = vmatmul.mubr.bf16.gmra.mrb[0].mxu0 %v1045
  %v1281 = vpop.f32.mrb[0].mxu0
  %v1282 = vadd.f32 %v1069, %v1281
  %v1283 = vpop.f32.mrb[0].mxu0
  %v1284 = vpop.f32.mrb[0].mxu0
  %v1285 = vadd.f32 %v1069, %v1284
  %v1286 = vpop.f32.mrb[0].mxu0
  %1287 = vmatprep.mubr.bf16.mxu0 0
  %1288 = vmatmul.mubr.bf16.gmra.mrb[0].mxu0 %v1046
  %v1289 = vpop.f32.mrb[0].mxu0
  %v1290 = vadd.f32 %v1069, %v1289
  %v1291 = vpop.f32.mrb[0].mxu0
  %v1292 = vpop.f32.mrb[0].mxu0
  %v1293 = vadd.f32 %v1069, %v1292
  %v1294 = vpop.f32.mrb[0].mxu0
  %1295 = vmatprep.mubr.bf16.mxu0 0
  %1296 = vmatmul.mubr.bf16.gmra.mrb[0].mxu0 %v1047
  %v1297 = vpop.f32.mrb[0].mxu0
  %v1298 = vadd.f32 %v1069, %v1297
  %v1299 = vpop.f32.mrb[0].mxu0
  %v1300 = vpop.f32.mrb[0].mxu0
  %v1301 = vadd.f32 %v1069, %v1300
  %v1302 = vpop.f32.mrb[0].mxu0
  %1303 = vmatprep.mubr.bf16.mxu0 0
  %1304 = vmatmul.mubr.bf16.gmra.mrb[0].mxu0 %v1048
  %v1305 = vpop.f32.mrb[0].mxu0
  %v1306 = vadd.f32 %v1069, %v1305
  %v1307 = vpop.f32.mrb[0].mxu0
  %v1308 = vpop.f32.mrb[0].mxu0
  %v1309 = vadd.f32 %v1069, %v1308
  %v1310 = vpop.f32.mrb[0].mxu0
  %1311 = vdwg.mxu0
  %v1312 = vtanh.pop %v1153
  %v1313 = vtanh.pop %v1156
  %v1314 = vtanh.pop %v1161
  %v1315 = vtanh.pop %v1164
  %v1316 = vtanh.pop %v1169
  %v1317 = vtanh.pop %v1172
  %v1318 = vtanh.pop %v1177
  %v1319 = vtanh.pop %v1180
  %v1320 = vtanh.pop %v1185
  %v1321 = vtanh.pop %v1188
  %v1322 = vtanh.pop %v1193
  %v1323 = vtanh.pop %v1196
  %v1324 = vtanh.pop %v1201
  %v1325 = vtanh.pop %v1204
  %v1326 = vtanh.pop %v1209
  %v1327 = vtanh.pop %v1212
  %v1328 = vtanh.pop %v1250
  %v1329 = vtanh.pop %v1253
  %v1330 = vtanh.pop %v1258
  %v1331 = vtanh.pop %v1261
  %v1332 = vtanh.pop %v1266
  %v1333 = vtanh.pop %v1269
  %v1334 = vtanh.pop %v1274
  %v1335 = vtanh.pop %v1277
  %v1336 = vtanh.pop %v1282
  %v1337 = vtanh.pop %v1285
  %v1338 = vtanh.pop %v1290
  %v1339 = vtanh.pop %v1293
  %v1340 = vtanh.pop %v1298
  %v1341 = vtanh.pop %v1301
  %v1342 = vtanh.pop %v1306
  %v1343 = vtanh.pop %v1309
  %v1344 = vpack.c.bf16 %v1313, %v1312
  %v1345 = vpack.c.bf16 %v1315, %v1314
  %v1346 = vpack.c.bf16 %v1317, %v1316
  %v1347 = vpack.c.bf16 %v1319, %v1318
  %v1348 = vpack.c.bf16 %v1321, %v1320
  %v1349 = vpack.c.bf16 %v1323, %v1322
  %v1350 = vpack.c.bf16 %v1325, %v1324
  %v1351 = vpack.c.bf16 %v1327, %v1326
  %v1352 = vpack.c.bf16 %v1329, %v1328
  %v1353 = vpack.c.bf16 %v1331, %v1330
  %v1354 = vpack.c.bf16 %v1333, %v1332
  %v1355 = vpack.c.bf16 %v1335, %v1334
  %v1356 = vpack.c.bf16 %v1337, %v1336
  %v1357 = vpack.c.bf16 %v1339, %v1338
  %v1358 = vpack.c.bf16 %v1341, %v1340
  %v1359 = vpack.c.bf16 %v1343, %v1342
  %v1360 = vld [vmem:[%s2 + $0x100] sm:$0xf]
  %v1361 = vld [vmem:[%s2 + $0x104] sm:$0xf]
  %v1362 = vld [vmem:[%s2 + $0x108] sm:$0xf]
  %v1363 = vld [vmem:[%s2 + $0x10c] sm:$0xf]
  %v1364 = vld [vmem:[%s2 + $0x110] sm:$0xf]
  %v1365 = vld [vmem:[%s2 + $0x114] sm:$0xf]
  %v1366 = vld [vmem:[%s2 + $0x118] sm:$0xf]
  %v1367 = vld [vmem:[%s2 + $0x11c] sm:$0xf]
  %v1368 = vld [vmem:[%s2 + $0x120] sm:$0xf]
  %v1369 = vld [vmem:[%s2 + $0x124] sm:$0xf]
  %v1370 = vld [vmem:[%s2 + $0x128] sm:$0xf]
  %v1371 = vld [vmem:[%s2 + $0x12c] sm:$0xf]
  %v1372 = vld [vmem:[%s2 + $0x130] sm:$0xf]
  %v1373 = vld [vmem:[%s2 + $0x134] sm:$0xf]
  %v1374 = vld [vmem:[%s2 + $0x138] sm:$0xf]
  %v1375 = vld [vmem:[%s2 + $0x13c] sm:$0xf]
  %v1376 = vld [vmem:[%s3 + $0x20] sm:$0xff]
  %v1377 = vlaneseq
  %v1378 = vshrl.u32 %v1377, 7
  %v1379 = vsub.s32 0, %v1378
  %v1380 = vrot.slane %v1376, %v1379
  %v1397 = vunpack.c.l.b16 %v1360
  %v1398 = vunpack.c.l.b16 %v1361
  %v1399 = vunpack.c.l.b16 %v1362
  %v1400 = vunpack.c.l.b16 %v1363
  %v1401 = vunpack.c.l.b16 %v1364
  %v1402 = vunpack.c.l.b16 %v1365
  %v1403 = vunpack.c.l.b16 %v1366
  %v1404 = vunpack.c.l.b16 %v1367
  %v1405 = vunpack.c.l.b16 %v1368
  %v1406 = vunpack.c.l.b16 %v1369
  %v1407 = vunpack.c.l.b16 %v1370
  %v1408 = vunpack.c.l.b16 %v1371
  %v1409 = vunpack.c.l.b16 %v1372
  %v1410 = vunpack.c.l.b16 %v1373
  %v1411 = vunpack.c.l.b16 %v1374
  %v1412 = vunpack.c.l.b16 %v1375
  %v1413 = vpack.c.b16 %v1398, %v1397
  %v1414 = vpack.c.b16 %v1400, %v1399
  %v1415 = vpack.c.b16 %v1402, %v1401
  %v1416 = vpack.c.b16 %v1404, %v1403
  %v1417 = vpack.c.b16 %v1406, %v1405
  %v1418 = vpack.c.b16 %v1408, %v1407
  %v1419 = vpack.c.b16 %v1410, %v1409
  %v1420 = vpack.c.b16 %v1412, %v1411
  %1429 = vmatprep.subr.bf16.mxu0 0
  %1430 = vmatpush1.bf16.msra.mxu0 %v1413
  %1431 = vmatprep.subr.bf16.mxu0 0
  %1432 = vmatpush1.bf16.msra.mxu0 %v1414
  %1433 = vmatprep.subr.bf16.mxu0 0
  %1434 = vmatpush1.bf16.msra.mxu0 %v1415
  %1435 = vmatprep.subr.bf16.mxu0 0
  %1436 = vmatpush1.bf16.msra.mxu0 %v1416
  %1437 = vmatprep.subr.bf16.mxu0 0
  %1438 = vmatpush1.bf16.msra.mxu0 %v1417
  %1439 = vmatprep.subr.bf16.mxu0 0
  %1440 = vmatpush1.bf16.msra.mxu0 %v1418
  %1441 = vmatprep.subr.bf16.mxu0 0
  %1442 = vmatpush1.bf16.msra.mxu0 %v1419
  %1443 = vmatprep.subr.bf16.mxu0 0
  %1444 = vmatpush1.bf16.msra.mxu0 %v1420
  %1445 = vmatprep.subr.bf16.mxu0 0
  %1446 = vmatpush1.bf16.msra.mxu0 0
  %1447 = vmatprep.subr.bf16.mxu0 0
  %1448 = vmatpush1.bf16.msra.mxu0 0
  %1449 = vmatprep.subr.bf16.mxu0 0
  %1450 = vmatpush1.bf16.msra.mxu0 0
  %1451 = vmatprep.subr.bf16.mxu0 0
  %1452 = vmatpush1.bf16.msra.mxu0 0
  %1453 = vmatprep.subr.bf16.mxu0 0
  %1454 = vmatpush1.bf16.msra.mxu0 0
  %1455 = vmatprep.subr.bf16.mxu0 0
  %1456 = vmatpush1.bf16.msra.mxu0 0
  %1457 = vmatprep.subr.bf16.mxu0 0
  %1458 = vmatpush1.bf16.msra.mxu0 0
  %1459 = vmatprep.subr.bf16.mxu0 0
  %1460 = vmatpush1.bf16.msra.mxu0 0
  %1461 = vmatprep.mubr.bf16.mxu0 0
  %1462 = vmatmul.mubr.bf16.gmra.mrb[0].mxu0 %v1344
  %v1463 = vpop.f32.mrb[0].mxu0
  %v1464 = vadd.f32 %v1380, %v1463
  %v1465 = vpop.f32.mrb[0].mxu0
  %v1466 = vpop.f32.mrb[0].mxu0
  %v1467 = vadd.f32 %v1380, %v1466
  %v1468 = vpop.f32.mrb[0].mxu0
  %1469 = vmatprep.mubr.bf16.mxu0 0
  %1470 = vmatmul.mubr.bf16.gmra.mrb[0].mxu0 %v1345
  %v1471 = vpop.f32.mrb[0].mxu0
  %v1472 = vadd.f32 %v1380, %v1471
  %v1473 = vpop.f32.mrb[0].mxu0
  %v1474 = vpop.f32.mrb[0].mxu0
  %v1475 = vadd.f32 %v1380, %v1474
  %v1476 = vpop.f32.mrb[0].mxu0
  %1477 = vmatprep.mubr.bf16.mxu0 0
  %1478 = vmatmul.mubr.bf16.gmra.mrb[0].mxu0 %v1346
  %v1479 = vpop.f32.mrb[0].mxu0
  %v1480 = vadd.f32 %v1380, %v1479
  %v1481 = vpop.f32.mrb[0].mxu0
  %v1482 = vpop.f32.mrb[0].mxu0
  %v1483 = vadd.f32 %v1380, %v1482
  %v1484 = vpop.f32.mrb[0].mxu0
  %1485 = vmatprep.mubr.bf16.mxu0 0
  %1486 = vmatmul.mubr.bf16.gmra.mrb[0].mxu0 %v1347
  %v1487 = vpop.f32.mrb[0].mxu0
  %v1488 = vadd.f32 %v1380, %v1487
  %v1489 = vpop.f32.mrb[0].mxu0
  %v1490 = vpop.f32.mrb[0].mxu0
  %v1491 = vadd.f32 %v1380, %v1490
  %v1492 = vpop.f32.mrb[0].mxu0
  %1493 = vmatprep.mubr.bf16.mxu0 0
  %1494 = vmatmul.mubr.bf16.gmra.mrb[0].mxu0 %v1348
  %v1495 = vpop.f32.mrb[0].mxu0
  %v1496 = vadd.f32 %v1380, %v1495
  %v1497 = vpop.f32.mrb[0].mxu0
  %v1498 = vpop.f32.mrb[0].mxu0
  %v1499 = vadd.f32 %v1380, %v1498
  %v1500 = vpop.f32.mrb[0].mxu0
  %1501 = vmatprep.mubr.bf16.mxu0 0
  %1502 = vmatmul.mubr.bf16.gmra.mrb[0].mxu0 %v1349
  %v1503 = vpop.f32.mrb[0].mxu0
  %v1504 = vadd.f32 %v1380, %v1503
  %v1505 = vpop.f32.mrb[0].mxu0
  %v1506 = vpop.f32.mrb[0].mxu0
  %v1507 = vadd.f32 %v1380, %v1506
  %v1508 = vpop.f32.mrb[0].mxu0
  %1509 = vmatprep.mubr.bf16.mxu0 0
  %1510 = vmatmul.mubr.bf16.gmra.mrb[0].mxu0 %v1350
  %v1511 = vpop.f32.mrb[0].mxu0
  %v1512 = vadd.f32 %v1380, %v1511
  %v1513 = vpop.f32.mrb[0].mxu0
  %v1514 = vpop.f32.mrb[0].mxu0
  %v1515 = vadd.f32 %v1380, %v1514
  %v1516 = vpop.f32.mrb[0].mxu0
  %1517 = vmatprep.mubr.bf16.mxu0 0
  %1518 = vmatmul.mubr.bf16.gmra.mrb[0].mxu0 %v1351
  %v1519 = vpop.f32.mrb[0].mxu0
  %v1520 = vadd.f32 %v1380, %v1519
  %v1521 = vpop.f32.mrb[0].mxu0
  %v1522 = vpop.f32.mrb[0].mxu0
  %v1523 = vadd.f32 %v1380, %v1522
  %v1524 = vpop.f32.mrb[0].mxu0
  %1525 = vdwg.mxu0
  %1526 = vmatprep.subr.bf16.mxu0 0
  %1527 = vmatpush1.bf16.msra.mxu0 %v1413
  %1528 = vmatprep.subr.bf16.mxu0 0
  %1529 = vmatpush1.bf16.msra.mxu0 %v1414
  %1530 = vmatprep.subr.bf16.mxu0 0
  %1531 = vmatpush1.bf16.msra.mxu0 %v1415
  %1532 = vmatprep.subr.bf16.mxu0 0
  %1533 = vmatpush1.bf16.msra.mxu0 %v1416
  %1534 = vmatprep.subr.bf16.mxu0 0
  %1535 = vmatpush1.bf16.msra.mxu0 %v1417
  %1536 = vmatprep.subr.bf16.mxu0 0
  %1537 = vmatpush1.bf16.msra.mxu0 %v1418
  %1538 = vmatprep.subr.bf16.mxu0 0
  %1539 = vmatpush1.bf16.msra.mxu0 %v1419
  %1540 = vmatprep.subr.bf16.mxu0 0
  %1541 = vmatpush1.bf16.msra.mxu0 %v1420
  %1542 = vmatprep.subr.bf16.mxu0 0
  %1543 = vmatpush1.bf16.msra.mxu0 0
  %1544 = vmatprep.subr.bf16.mxu0 0
  %1545 = vmatpush1.bf16.msra.mxu0 0
  %1546 = vmatprep.subr.bf16.mxu0 0
  %1547 = vmatpush1.bf16.msra.mxu0 0
  %1548 = vmatprep.subr.bf16.mxu0 0
  %1549 = vmatpush1.bf16.msra.mxu0 0
  %1550 = vmatprep.subr.bf16.mxu0 0
  %1551 = vmatpush1.bf16.msra.mxu0 0
  %1552 = vmatprep.subr.bf16.mxu0 0
  %1553 = vmatpush1.bf16.msra.mxu0 0
  %1554 = vmatprep.subr.bf16.mxu0 0
  %1555 = vmatpush1.bf16.msra.mxu0 0
  %1556 = vmatprep.subr.bf16.mxu0 0
  %1557 = vmatpush1.bf16.msra.mxu0 0
  %1558 = vmatprep.mubr.bf16.mxu0 0
  %1559 = vmatmul.mubr.bf16.gmra.mrb[0].mxu0 %v1352
  %v1560 = vpop.f32.mrb[0].mxu0
  %v1561 = vadd.f32 %v1380, %v1560
  %v1562 = vpop.f32.mrb[0].mxu0
  %v1563 = vpop.f32.mrb[0].mxu0
  %v1564 = vadd.f32 %v1380, %v1563
  %v1565 = vpop.f32.mrb[0].mxu0
  %1566 = vmatprep.mubr.bf16.mxu0 0
  %1567 = vmatmul.mubr.bf16.gmra.mrb[0].mxu0 %v1353
  %v1568 = vpop.f32.mrb[0].mxu0
  %v1569 = vadd.f32 %v1380, %v1568
  %v1570 = vpop.f32.mrb[0].mxu0
  %v1571 = vpop.f32.mrb[0].mxu0
  %v1572 = vadd.f32 %v1380, %v1571
  %v1573 = vpop.f32.mrb[0].mxu0
  %1574 = vmatprep.mubr.bf16.mxu0 0
  %1575 = vmatmul.mubr.bf16.gmra.mrb[0].mxu0 %v1354
  %v1576 = vpop.f32.mrb[0].mxu0
  %v1577 = vadd.f32 %v1380, %v1576
  %v1578 = vpop.f32.mrb[0].mxu0
  %v1579 = vpop.f32.mrb[0].mxu0
  %v1580 = vadd.f32 %v1380, %v1579
  %v1581 = vpop.f32.mrb[0].mxu0
  %1582 = vmatprep.mubr.bf16.mxu0 0
  %1583 = vmatmul.mubr.bf16.gmra.mrb[0].mxu0 %v1355
  %v1584 = vpop.f32.mrb[0].mxu0
  %v1585 = vadd.f32 %v1380, %v1584
  %v1586 = vpop.f32.mrb[0].mxu0
  %v1587 = vpop.f32.mrb[0].mxu0
  %v1588 = vadd.f32 %v1380, %v1587
  %v1589 = vpop.f32.mrb[0].mxu0
  %1590 = vmatprep.mubr.bf16.mxu0 0
  %1591 = vmatmul.mubr.bf16.gmra.mrb[0].mxu0 %v1356
  %v1592 = vpop.f32.mrb[0].mxu0
  %v1593 = vadd.f32 %v1380, %v1592
  %v1594 = vpop.f32.mrb[0].mxu0
  %v1595 = vpop.f32.mrb[0].mxu0
  %v1596 = vadd.f32 %v1380, %v1595
  %v1597 = vpop.f32.mrb[0].mxu0
  %1598 = vmatprep.mubr.bf16.mxu0 0
  %1599 = vmatmul.mubr.bf16.gmra.mrb[0].mxu0 %v1357
  %v1600 = vpop.f32.mrb[0].mxu0
  %v1601 = vadd.f32 %v1380, %v1600
  %v1602 = vpop.f32.mrb[0].mxu0
  %v1603 = vpop.f32.mrb[0].mxu0
  %v1604 = vadd.f32 %v1380, %v1603
  %v1605 = vpop.f32.mrb[0].mxu0
  %1606 = vmatprep.mubr.bf16.mxu0 0
  %1607 = vmatmul.mubr.bf16.gmra.mrb[0].mxu0 %v1358
  %v1608 = vpop.f32.mrb[0].mxu0
  %v1609 = vadd.f32 %v1380, %v1608
  %v1610 = vpop.f32.mrb[0].mxu0
  %v1611 = vpop.f32.mrb[0].mxu0
  %v1612 = vadd.f32 %v1380, %v1611
  %v1613 = vpop.f32.mrb[0].mxu0
  %1614 = vmatprep.mubr.bf16.mxu0 0
  %1615 = vmatmul.mubr.bf16.gmra.mrb[0].mxu0 %v1359
  %v1616 = vpop.f32.mrb[0].mxu0
  %v1617 = vadd.f32 %v1380, %v1616
  %v1618 = vpop.f32.mrb[0].mxu0
  %v1619 = vpop.f32.mrb[0].mxu0
  %v1620 = vadd.f32 %v1380, %v1619
  %v1621 = vpop.f32.mrb[0].mxu0
  %1622 = vdwg.mxu0
  %v1623 = vtanh.pop %v1464
  %v1624 = vtanh.pop %v1467
  %v1625 = vtanh.pop %v1472
  %v1626 = vtanh.pop %v1475
  %v1627 = vtanh.pop %v1480
  %v1628 = vtanh.pop %v1483
  %v1629 = vtanh.pop %v1488
  %v1630 = vtanh.pop %v1491
  %v1631 = vtanh.pop %v1496
  %v1632 = vtanh.pop %v1499
  %v1633 = vtanh.pop %v1504
  %v1634 = vtanh.pop %v1507
  %v1635 = vtanh.pop %v1512
  %v1636 = vtanh.pop %v1515
  %v1637 = vtanh.pop %v1520
  %v1638 = vtanh.pop %v1523
  %v1639 = vtanh.pop %v1561
  %v1640 = vtanh.pop %v1564
  %v1641 = vtanh.pop %v1569
  %v1642 = vtanh.pop %v1572
  %v1643 = vtanh.pop %v1577
  %v1644 = vtanh.pop %v1580
  %v1645 = vtanh.pop %v1585
  %v1646 = vtanh.pop %v1588
  %v1647 = vtanh.pop %v1593
  %v1648 = vtanh.pop %v1596
  %v1649 = vtanh.pop %v1601
  %v1650 = vtanh.pop %v1604
  %v1651 = vtanh.pop %v1609
  %v1652 = vtanh.pop %v1612
  %v1653 = vtanh.pop %v1617
  %v1654 = vtanh.pop %v1620
  %v1655 = vpack.c.bf16 %v1624, %v1623
  %v1656 = vpack.c.bf16 %v1626, %v1625
  %v1657 = vpack.c.bf16 %v1628, %v1627
  %v1658 = vpack.c.bf16 %v1630, %v1629
  %v1659 = vpack.c.bf16 %v1632, %v1631
  %v1660 = vpack.c.bf16 %v1634, %v1633
  %v1661 = vpack.c.bf16 %v1636, %v1635
  %v1662 = vpack.c.bf16 %v1638, %v1637
  %v1663 = vpack.c.bf16 %v1640, %v1639
  %v1664 = vpack.c.bf16 %v1642, %v1641
  %v1665 = vpack.c.bf16 %v1644, %v1643
  %v1666 = vpack.c.bf16 %v1646, %v1645
  %v1667 = vpack.c.bf16 %v1648, %v1647
  %v1668 = vpack.c.bf16 %v1650, %v1649
  %v1669 = vpack.c.bf16 %v1652, %v1651
  %v1670 = vpack.c.bf16 %v1654, %v1653
  %v1671 = vld [vmem:[%s2 + $0x140] sm:$0xf]
  %v1672 = vld [vmem:[%s2 + $0x144] sm:$0xf]
  %v1673 = vld [vmem:[%s2 + $0x148] sm:$0xf]
  %v1674 = vld [vmem:[%s2 + $0x14c] sm:$0xf]
  %v1675 = vld [vmem:[%s2 + $0x150] sm:$0xf]
  %v1676 = vld [vmem:[%s2 + $0x154] sm:$0xf]
  %v1677 = vld [vmem:[%s2 + $0x158] sm:$0xf]
  %v1678 = vld [vmem:[%s2 + $0x15c] sm:$0xf]
  %v1679 = vld [vmem:[%s2 + $0x160] sm:$0xf]
  %v1680 = vld [vmem:[%s2 + $0x164] sm:$0xf]
  %v1681 = vld [vmem:[%s2 + $0x168] sm:$0xf]
  %v1682 = vld [vmem:[%s2 + $0x16c] sm:$0xf]
  %v1683 = vld [vmem:[%s2 + $0x170] sm:$0xf]
  %v1684 = vld [vmem:[%s2 + $0x174] sm:$0xf]
  %v1685 = vld [vmem:[%s2 + $0x178] sm:$0xf]
  %v1686 = vld [vmem:[%s2 + $0x17c] sm:$0xf]
  %v1687 = vld [vmem:[%s3 + $0x28] sm:$0xff]
  %v1688 = vlaneseq
  %v1689 = vshrl.u32 %v1688, 7
  %v1690 = vsub.s32 0, %v1689
  %v1691 = vrot.slane %v1687, %v1690
  %v1708 = vunpack.c.l.b16 %v1671
  %v1709 = vunpack.c.l.b16 %v1672
  %v1710 = vunpack.c.l.b16 %v1673
  %v1711 = vunpack.c.l.b16 %v1674
  %v1712 = vunpack.c.l.b16 %v1675
  %v1713 = vunpack.c.l.b16 %v1676
  %v1714 = vunpack.c.l.b16 %v1677
  %v1715 = vunpack.c.l.b16 %v1678
  %v1716 = vunpack.c.l.b16 %v1679
  %v1717 = vunpack.c.l.b16 %v1680
  %v1718 = vunpack.c.l.b16 %v1681
  %v1719 = vunpack.c.l.b16 %v1682
  %v1720 = vunpack.c.l.b16 %v1683
  %v1721 = vunpack.c.l.b16 %v1684
  %v1722 = vunpack.c.l.b16 %v1685
  %v1723 = vunpack.c.l.b16 %v1686
  %v1724 = vpack.c.b16 %v1709, %v1708
  %v1725 = vpack.c.b16 %v1711, %v1710
  %v1726 = vpack.c.b16 %v1713, %v1712
  %v1727 = vpack.c.b16 %v1715, %v1714
  %v1728 = vpack.c.b16 %v1717, %v1716
  %v1729 = vpack.c.b16 %v1719, %v1718
  %v1730 = vpack.c.b16 %v1721, %v1720
  %v1731 = vpack.c.b16 %v1723, %v1722
  %1740 = vmatprep.subr.bf16.mxu0 0
  %1741 = vmatpush1.bf16.msra.mxu0 %v1724
  %1742 = vmatprep.subr.bf16.mxu0 0
  %1743 = vmatpush1.bf16.msra.mxu0 %v1725
  %1744 = vmatprep.subr.bf16.mxu0 0
  %1745 = vmatpush1.bf16.msra.mxu0 %v1726
  %1746 = vmatprep.subr.bf16.mxu0 0
  %1747 = vmatpush1.bf16.msra.mxu0 %v1727
  %1748 = vmatprep.subr.bf16.mxu0 0
  %1749 = vmatpush1.bf16.msra.mxu0 %v1728
  %1750 = vmatprep.subr.bf16.mxu0 0
  %1751 = vmatpush1.bf16.msra.mxu0 %v1729
  %1752 = vmatprep.subr.bf16.mxu0 0
  %1753 = vmatpush1.bf16.msra.mxu0 %v1730
  %1754 = vmatprep.subr.bf16.mxu0 0
  %1755 = vmatpush1.bf16.msra.mxu0 %v1731
  %1756 = vmatprep.subr.bf16.mxu0 0
  %1757 = vmatpush1.bf16.msra.mxu0 0
  %1758 = vmatprep.subr.bf16.mxu0 0
  %1759 = vmatpush1.bf16.msra.mxu0 0
  %1760 = vmatprep.subr.bf16.mxu0 0
  %1761 = vmatpush1.bf16.msra.mxu0 0
  %1762 = vmatprep.subr.bf16.mxu0 0
  %1763 = vmatpush1.bf16.msra.mxu0 0
  %1764 = vmatprep.subr.bf16.mxu0 0
  %1765 = vmatpush1.bf16.msra.mxu0 0
  %1766 = vmatprep.subr.bf16.mxu0 0
  %1767 = vmatpush1.bf16.msra.mxu0 0
  %1768 = vmatprep.subr.bf16.mxu0 0
  %1769 = vmatpush1.bf16.msra.mxu0 0
  %1770 = vmatprep.subr.bf16.mxu0 0
  %1771 = vmatpush1.bf16.msra.mxu0 0
  %1772 = vmatprep.mubr.bf16.mxu0 0
  %1773 = vmatmul.mubr.bf16.gmra.mrb[0].mxu0 %v1655
  %v1774 = vpop.f32.mrb[0].mxu0
  %v1775 = vadd.f32 %v1691, %v1774
  %v1776 = vpop.f32.mrb[0].mxu0
  %v1777 = vpop.f32.mrb[0].mxu0
  %v1778 = vadd.f32 %v1691, %v1777
  %v1779 = vpop.f32.mrb[0].mxu0
  %1780 = vmatprep.mubr.bf16.mxu0 0
  %1781 = vmatmul.mubr.bf16.gmra.mrb[0].mxu0 %v1656
  %v1782 = vpop.f32.mrb[0].mxu0
  %v1783 = vadd.f32 %v1691, %v1782
  %v1784 = vpop.f32.mrb[0].mxu0
  %v1785 = vpop.f32.mrb[0].mxu0
  %v1786 = vadd.f32 %v1691, %v1785
  %v1787 = vpop.f32.mrb[0].mxu0
  %1788 = vmatprep.mubr.bf16.mxu0 0
  %1789 = vmatmul.mubr.bf16.gmra.mrb[0].mxu0 %v1657
  %v1790 = vpop.f32.mrb[0].mxu0
  %v1791 = vadd.f32 %v1691, %v1790
  %v1792 = vpop.f32.mrb[0].mxu0
  %v1793 = vpop.f32.mrb[0].mxu0
  %v1794 = vadd.f32 %v1691, %v1793
  %v1795 = vpop.f32.mrb[0].mxu0
  %1796 = vmatprep.mubr.bf16.mxu0 0
  %1797 = vmatmul.mubr.bf16.gmra.mrb[0].mxu0 %v1658
  %v1798 = vpop.f32.mrb[0].mxu0
  %v1799 = vadd.f32 %v1691, %v1798
  %v1800 = vpop.f32.mrb[0].mxu0
  %v1801 = vpop.f32.mrb[0].mxu0
  %v1802 = vadd.f32 %v1691, %v1801
  %v1803 = vpop.f32.mrb[0].mxu0
  %1804 = vmatprep.mubr.bf16.mxu0 0
  %1805 = vmatmul.mubr.bf16.gmra.mrb[0].mxu0 %v1659
  %v1806 = vpop.f32.mrb[0].mxu0
  %v1807 = vadd.f32 %v1691, %v1806
  %v1808 = vpop.f32.mrb[0].mxu0
  %v1809 = vpop.f32.mrb[0].mxu0
  %v1810 = vadd.f32 %v1691, %v1809
  %v1811 = vpop.f32.mrb[0].mxu0
  %1812 = vmatprep.mubr.bf16.mxu0 0
  %1813 = vmatmul.mubr.bf16.gmra.mrb[0].mxu0 %v1660
  %v1814 = vpop.f32.mrb[0].mxu0
  %v1815 = vadd.f32 %v1691, %v1814
  %v1816 = vpop.f32.mrb[0].mxu0
  %v1817 = vpop.f32.mrb[0].mxu0
  %v1818 = vadd.f32 %v1691, %v1817
  %v1819 = vpop.f32.mrb[0].mxu0
  %1820 = vmatprep.mubr.bf16.mxu0 0
  %1821 = vmatmul.mubr.bf16.gmra.mrb[0].mxu0 %v1661
  %v1822 = vpop.f32.mrb[0].mxu0
  %v1823 = vadd.f32 %v1691, %v1822
  %v1824 = vpop.f32.mrb[0].mxu0
  %v1825 = vpop.f32.mrb[0].mxu0
  %v1826 = vadd.f32 %v1691, %v1825
  %v1827 = vpop.f32.mrb[0].mxu0
  %1828 = vmatprep.mubr.bf16.mxu0 0
  %1829 = vmatmul.mubr.bf16.gmra.mrb[0].mxu0 %v1662
  %v1830 = vpop.f32.mrb[0].mxu0
  %v1831 = vadd.f32 %v1691, %v1830
  %v1832 = vpop.f32.mrb[0].mxu0
  %v1833 = vpop.f32.mrb[0].mxu0
  %v1834 = vadd.f32 %v1691, %v1833
  %v1835 = vpop.f32.mrb[0].mxu0
  %1836 = vdwg.mxu0
  %1837 = vmatprep.subr.bf16.mxu0 0
  %1838 = vmatpush1.bf16.msra.mxu0 %v1724
  %1839 = vmatprep.subr.bf16.mxu0 0
  %1840 = vmatpush1.bf16.msra.mxu0 %v1725
  %1841 = vmatprep.subr.bf16.mxu0 0
  %1842 = vmatpush1.bf16.msra.mxu0 %v1726
  %1843 = vmatprep.subr.bf16.mxu0 0
  %1844 = vmatpush1.bf16.msra.mxu0 %v1727
  %1845 = vmatprep.subr.bf16.mxu0 0
  %1846 = vmatpush1.bf16.msra.mxu0 %v1728
  %1847 = vmatprep.subr.bf16.mxu0 0
  %1848 = vmatpush1.bf16.msra.mxu0 %v1729
  %1849 = vmatprep.subr.bf16.mxu0 0
  %1850 = vmatpush1.bf16.msra.mxu0 %v1730
  %1851 = vmatprep.subr.bf16.mxu0 0
  %1852 = vmatpush1.bf16.msra.mxu0 %v1731
  %1853 = vmatprep.subr.bf16.mxu0 0
  %1854 = vmatpush1.bf16.msra.mxu0 0
  %1855 = vmatprep.subr.bf16.mxu0 0
  %1856 = vmatpush1.bf16.msra.mxu0 0
  %1857 = vmatprep.subr.bf16.mxu0 0
  %1858 = vmatpush1.bf16.msra.mxu0 0
  %1859 = vmatprep.subr.bf16.mxu0 0
  %1860 = vmatpush1.bf16.msra.mxu0 0
  %1861 = vmatprep.subr.bf16.mxu0 0
  %1862 = vmatpush1.bf16.msra.mxu0 0
  %1863 = vmatprep.subr.bf16.mxu0 0
  %1864 = vmatpush1.bf16.msra.mxu0 0
  %1865 = vmatprep.subr.bf16.mxu0 0
  %1866 = vmatpush1.bf16.msra.mxu0 0
  %1867 = vmatprep.subr.bf16.mxu0 0
  %1868 = vmatpush1.bf16.msra.mxu0 0
  %1869 = vmatprep.mubr.bf16.mxu0 0
  %1870 = vmatmul.mubr.bf16.gmra.mrb[0].mxu0 %v1663
  %v1871 = vpop.f32.mrb[0].mxu0
  %v1872 = vadd.f32 %v1691, %v1871
  %v1873 = vpop.f32.mrb[0].mxu0
  %v1874 = vpop.f32.mrb[0].mxu0
  %v1875 = vadd.f32 %v1691, %v1874
  %v1876 = vpop.f32.mrb[0].mxu0
  %1877 = vmatprep.mubr.bf16.mxu0 0
  %1878 = vmatmul.mubr.bf16.gmra.mrb[0].mxu0 %v1664
  %v1879 = vpop.f32.mrb[0].mxu0
  %v1880 = vadd.f32 %v1691, %v1879
  %v1881 = vpop.f32.mrb[0].mxu0
  %v1882 = vpop.f32.mrb[0].mxu0
  %v1883 = vadd.f32 %v1691, %v1882
  %v1884 = vpop.f32.mrb[0].mxu0
  %1885 = vmatprep.mubr.bf16.mxu0 0
  %1886 = vmatmul.mubr.bf16.gmra.mrb[0].mxu0 %v1665
  %v1887 = vpop.f32.mrb[0].mxu0
  %v1888 = vadd.f32 %v1691, %v1887
  %v1889 = vpop.f32.mrb[0].mxu0
  %v1890 = vpop.f32.mrb[0].mxu0
  %v1891 = vadd.f32 %v1691, %v1890
  %v1892 = vpop.f32.mrb[0].mxu0
  %1893 = vmatprep.mubr.bf16.mxu0 0
  %1894 = vmatmul.mubr.bf16.gmra.mrb[0].mxu0 %v1666
  %v1895 = vpop.f32.mrb[0].mxu0
  %v1896 = vadd.f32 %v1691, %v1895
  %v1897 = vpop.f32.mrb[0].mxu0
  %v1898 = vpop.f32.mrb[0].mxu0
  %v1899 = vadd.f32 %v1691, %v1898
  %v1900 = vpop.f32.mrb[0].mxu0
  %1901 = vmatprep.mubr.bf16.mxu0 0
  %1902 = vmatmul.mubr.bf16.gmra.mrb[0].mxu0 %v1667
  %v1903 = vpop.f32.mrb[0].mxu0
  %v1904 = vadd.f32 %v1691, %v1903
  %v1905 = vpop.f32.mrb[0].mxu0
  %v1906 = vpop.f32.mrb[0].mxu0
  %v1907 = vadd.f32 %v1691, %v1906
  %v1908 = vpop.f32.mrb[0].mxu0
  %1909 = vmatprep.mubr.bf16.mxu0 0
  %1910 = vmatmul.mubr.bf16.gmra.mrb[0].mxu0 %v1668
  %v1911 = vpop.f32.mrb[0].mxu0
  %v1912 = vadd.f32 %v1691, %v1911
  %v1913 = vpop.f32.mrb[0].mxu0
  %v1914 = vpop.f32.mrb[0].mxu0
  %v1915 = vadd.f32 %v1691, %v1914
  %v1916 = vpop.f32.mrb[0].mxu0
  %1917 = vmatprep.mubr.bf16.mxu0 0
  %1918 = vmatmul.mubr.bf16.gmra.mrb[0].mxu0 %v1669
  %v1919 = vpop.f32.mrb[0].mxu0
  %v1920 = vadd.f32 %v1691, %v1919
  %v1921 = vpop.f32.mrb[0].mxu0
  %v1922 = vpop.f32.mrb[0].mxu0
  %v1923 = vadd.f32 %v1691, %v1922
  %v1924 = vpop.f32.mrb[0].mxu0
  %1925 = vmatprep.mubr.bf16.mxu0 0
  %1926 = vmatmul.mubr.bf16.gmra.mrb[0].mxu0 %v1670
  %v1927 = vpop.f32.mrb[0].mxu0
  %v1928 = vadd.f32 %v1691, %v1927
  %v1929 = vpop.f32.mrb[0].mxu0
  %v1930 = vpop.f32.mrb[0].mxu0
  %v1931 = vadd.f32 %v1691, %v1930
  %v1932 = vpop.f32.mrb[0].mxu0
  %1933 = vdwg.mxu0
  %1934 = vst [vmem:[%s4] sm:$0xff] %v1775
  %1935 = vst [vmem:[%s4 + $0x8] sm:$0xff] %v1778
  %1936 = vst [vmem:[%s4 + $0x10] sm:$0xff] %v1783
  %1937 = vst [vmem:[%s4 + $0x18] sm:$0xff] %v1786
  %1938 = vst [vmem:[%s4 + $0x20] sm:$0xff] %v1791
  %1939 = vst [vmem:[%s4 + $0x28] sm:$0xff] %v1794
  %1940 = vst [vmem:[%s4 + $0x30] sm:$0xff] %v1799
  %1941 = vst [vmem:[%s4 + $0x38] sm:$0xff] %v1802
  %1942 = vst [vmem:[%s4 + $0x40] sm:$0xff] %v1807
  %1943 = vst [vmem:[%s4 + $0x48] sm:$0xff] %v1810
  %1944 = vst [vmem:[%s4 + $0x50] sm:$0xff] %v1815
  %1945 = vst [vmem:[%s4 + $0x58] sm:$0xff] %v1818
  %1946 = vst [vmem:[%s4 + $0x60] sm:$0xff] %v1823
  %1947 = vst [vmem:[%s4 + $0x68] sm:$0xff] %v1826
  %1948 = vst [vmem:[%s4 + $0x70] sm:$0xff] %v1831
  %1949 = vst [vmem:[%s4 + $0x78] sm:$0xff] %v1834
  %1950 = vst [vmem:[%s4 + $0x80] sm:$0xff] %v1872
  %1951 = vst [vmem:[%s4 + $0x88] sm:$0xff] %v1875
  %1952 = vst [vmem:[%s4 + $0x90] sm:$0xff] %v1880
  %1953 = vst [vmem:[%s4 + $0x98] sm:$0xff] %v1883
  %1954 = vst [vmem:[%s4 + $0xa0] sm:$0xff] %v1888
  %1955 = vst [vmem:[%s4 + $0xa8] sm:$0xff] %v1891
  %1956 = vst [vmem:[%s4 + $0xb0] sm:$0xff] %v1896
  %1957 = vst [vmem:[%s4 + $0xb8] sm:$0xff] %v1899
  %1958 = vst [vmem:[%s4 + $0xc0] sm:$0xff] %v1904
  %1959 = vst [vmem:[%s4 + $0xc8] sm:$0xff] %v1907
  %1960 = vst [vmem:[%s4 + $0xd0] sm:$0xff] %v1912
  %1961 = vst [vmem:[%s4 + $0xd8] sm:$0xff] %v1915
  %1962 = vst [vmem:[%s4 + $0xe0] sm:$0xff] %v1920
  %1963 = vst [vmem:[%s4 + $0xe8] sm:$0xff] %v1923
  %1964 = vst [vmem:[%s4 + $0xf0] sm:$0xff] %v1928
  %1965 = vst [vmem:[%s4 + $0xf8] sm:$0xff] %v1931
  %v1966 = vld [vmem:[%s1] sm:$0xff]
  %v1967 = vld [vmem:[%s1 + $0x8] sm:$0xff]
  %v1968 = vld [vmem:[%s1 + $0x10] sm:$0xff]
  %v1969 = vld [vmem:[%s1 + $0x18] sm:$0xff]
  %v1970 = vld [vmem:[%s1 + $0x20] sm:$0xff]
  %v1971 = vld [vmem:[%s1 + $0x28] sm:$0xff]
  %v1972 = vld [vmem:[%s1 + $0x30] sm:$0xff]
  %v1973 = vld [vmem:[%s1 + $0x38] sm:$0xff]
  %v1974 = vld [vmem:[%s1 + $0x40] sm:$0xff]
  %v1975 = vld [vmem:[%s1 + $0x48] sm:$0xff]
  %v1976 = vld [vmem:[%s1 + $0x50] sm:$0xff]
  %v1977 = vld [vmem:[%s1 + $0x58] sm:$0xff]
  %v1978 = vld [vmem:[%s1 + $0x60] sm:$0xff]
  %v1979 = vld [vmem:[%s1 + $0x68] sm:$0xff]
  %v1980 = vld [vmem:[%s1 + $0x70] sm:$0xff]
  %v1981 = vld [vmem:[%s1 + $0x78] sm:$0xff]
  %v1982 = vsub.f32 %v1966, %v1775
  %v1983 = vsub.f32 %v1967, %v1778
  %v1984 = vsub.f32 %v1968, %v1783
  %v1985 = vsub.f32 %v1969, %v1786
  %v1986 = vsub.f32 %v1970, %v1791
  %v1987 = vsub.f32 %v1971, %v1794
  %v1988 = vsub.f32 %v1972, %v1799
  %v1989 = vsub.f32 %v1973, %v1802
  %v1990 = vsub.f32 %v1974, %v1807
  %v1991 = vsub.f32 %v1975, %v1810
  %v1992 = vsub.f32 %v1976, %v1815
  %v1993 = vsub.f32 %v1977, %v1818
  %v1994 = vsub.f32 %v1978, %v1823
  %v1995 = vsub.f32 %v1979, %v1826
  %v1996 = vsub.f32 %v1980, %v1831
  %v1997 = vsub.f32 %v1981, %v1834
  %v1998 = vld [vmem:[%s1 + $0x80] sm:$0xff]
  %v1999 = vld [vmem:[%s1 + $0x88] sm:$0xff]
  %v2000 = vld [vmem:[%s1 + $0x90] sm:$0xff]
  %v2001 = vld [vmem:[%s1 + $0x98] sm:$0xff]
  %v2002 = vld [vmem:[%s1 + $0xa0] sm:$0xff]
  %v2003 = vld [vmem:[%s1 + $0xa8] sm:$0xff]
  %v2004 = vld [vmem:[%s1 + $0xb0] sm:$0xff]
  %v2005 = vld [vmem:[%s1 + $0xb8] sm:$0xff]
  %v2006 = vld [vmem:[%s1 + $0xc0] sm:$0xff]
  %v2007 = vld [vmem:[%s1 + $0xc8] sm:$0xff]
  %v2008 = vld [vmem:[%s1 + $0xd0] sm:$0xff]
  %v2009 = vld [vmem:[%s1 + $0xd8] sm:$0xff]
  %v2010 = vld [vmem:[%s1 + $0xe0] sm:$0xff]
  %v2011 = vld [vmem:[%s1 + $0xe8] sm:$0xff]
  %v2012 = vld [vmem:[%s1 + $0xf0] sm:$0xff]
  %v2013 = vld [vmem:[%s1 + $0xf8] sm:$0xff]
  %v2014 = vsub.f32 %v1998, %v1872
  %v2015 = vsub.f32 %v1999, %v1875
  %v2016 = vsub.f32 %v2000, %v1880
  %v2017 = vsub.f32 %v2001, %v1883
  %v2018 = vsub.f32 %v2002, %v1888
  %v2019 = vsub.f32 %v2003, %v1891
  %v2020 = vsub.f32 %v2004, %v1896
  %v2021 = vsub.f32 %v2005, %v1899
  %v2022 = vsub.f32 %v2006, %v1904
  %v2023 = vsub.f32 %v2007, %v1907
  %v2024 = vsub.f32 %v2008, %v1912
  %v2025 = vsub.f32 %v2009, %v1915
  %v2026 = vsub.f32 %v2010, %v1920
  %v2027 = vsub.f32 %v2011, %v1923
  %v2028 = vsub.f32 %v2012, %v1928
  %v2029 = vsub.f32 %v2013, %v1931
  %v2030 = vmul.f32 %v1982, %v1982
  %v2031 = vmul.f32 %v1983, %v1983
  %v2032 = vmul.f32 %v1984, %v1984
  %v2033 = vmul.f32 %v1985, %v1985
  %v2034 = vmul.f32 %v1986, %v1986
  %v2035 = vmul.f32 %v1987, %v1987
  %v2036 = vmul.f32 %v1988, %v1988
  %v2037 = vmul.f32 %v1989, %v1989
  %v2038 = vmul.f32 %v1990, %v1990
  %v2039 = vmul.f32 %v1991, %v1991
  %v2040 = vmul.f32 %v1992, %v1992
  %v2041 = vmul.f32 %v1993, %v1993
  %v2042 = vmul.f32 %v1994, %v1994
  %v2043 = vmul.f32 %v1995, %v1995
  %v2044 = vmul.f32 %v1996, %v1996
  %v2045 = vmul.f32 %v1997, %v1997
  %v2046 = vadd.f32 %v2030, %v2031
  %v2047 = vadd.f32 %v2046, %v2032
  %v2048 = vadd.f32 %v2047, %v2033
  %v2049 = vadd.f32 %v2048, %v2034
  %v2050 = vadd.f32 %v2049, %v2035
  %v2051 = vadd.f32 %v2050, %v2036
  %v2052 = vadd.f32 %v2051, %v2037
  %v2053 = vadd.f32 %v2052, %v2038
  %v2054 = vadd.f32 %v2053, %v2039
  %v2055 = vadd.f32 %v2054, %v2040
  %v2056 = vadd.f32 %v2055, %v2041
  %v2057 = vadd.f32 %v2056, %v2042
  %v2058 = vadd.f32 %v2057, %v2043
  %v2059 = vadd.f32 %v2058, %v2044
  %v2060 = vadd.f32 %v2059, %v2045
  %v2061 = vrot.slane %v2060, 4
  %v2062 = vadd.f32 %v2060, %v2061
  %v2063 = vrot.slane %v2062, 2
  %v2064 = vadd.f32 %v2062, %v2063
  %v2065 = vrot.slane %v2064, 1
  %v2066 = vadd.f32 %v2064, %v2065
  %v2067 = vmul.f32 %v2014, %v2014
  %v2068 = vmul.f32 %v2015, %v2015
  %v2069 = vmul.f32 %v2016, %v2016
  %v2070 = vmul.f32 %v2017, %v2017
  %v2071 = vmul.f32 %v2018, %v2018
  %v2072 = vmul.f32 %v2019, %v2019
  %v2073 = vmul.f32 %v2020, %v2020
  %v2074 = vmul.f32 %v2021, %v2021
  %v2075 = vmul.f32 %v2022, %v2022
  %v2076 = vmul.f32 %v2023, %v2023
  %v2077 = vmul.f32 %v2024, %v2024
  %v2078 = vmul.f32 %v2025, %v2025
  %v2079 = vmul.f32 %v2026, %v2026
  %v2080 = vmul.f32 %v2027, %v2027
  %v2081 = vmul.f32 %v2028, %v2028
  %v2082 = vmul.f32 %v2029, %v2029
  %v2083 = vadd.f32 %v2067, %v2068
  %v2084 = vadd.f32 %v2083, %v2069
  %v2085 = vadd.f32 %v2084, %v2070
  %v2086 = vadd.f32 %v2085, %v2071
  %v2087 = vadd.f32 %v2086, %v2072
  %v2088 = vadd.f32 %v2087, %v2073
  %v2089 = vadd.f32 %v2088, %v2074
  %v2090 = vadd.f32 %v2089, %v2075
  %v2091 = vadd.f32 %v2090, %v2076
  %v2092 = vadd.f32 %v2091, %v2077
  %v2093 = vadd.f32 %v2092, %v2078
  %v2094 = vadd.f32 %v2093, %v2079
  %v2095 = vadd.f32 %v2094, %v2080
  %v2096 = vadd.f32 %v2095, %v2081
  %v2097 = vadd.f32 %v2096, %v2082
  %v2098 = vrot.slane %v2097, 4
  %v2099 = vadd.f32 %v2097, %v2098
  %v2100 = vrot.slane %v2099, 2
  %v2101 = vadd.f32 %v2099, %v2100
  %v2102 = vrot.slane %v2101, 1
  %v2103 = vadd.f32 %v2101, %v2102
  %v2104 = vadd.f32 %v2066, %v2103
  %2105 = vst [vmem:[%s5] sm:$0xff] %v2104
  // Predicated region
  $region18: #{_forward_impl.1} parent=0 // pred_check
    _
  $region19: #{_forward_impl.1} parent=0 // pred_check_branch
    %2107 = sbr.rel (0) target = $region21
  $region20: #{_forward_impl.1} parent=0 // pred_region
    _
  $region21: #{_forward_impl.1} parent=0 // pred_fallthru
    _
  // Predicated region
  $region22: #{_forward_impl.1} parent=0 // pred_check
    _
  $region23: #{_forward_impl.1} parent=0 // pred_check_branch
    %2109 = sbr.rel (0) target = $region25
  $region24: #{_forward_impl.1} parent=0 // pred_region
    _
  $region25: #{_forward_impl.1} parent=0 // pred_fallthru
    _
  // Predicated region
  $region26: #{_forward_impl.1} parent=0 // pred_check
    _
  $region27: #{_forward_impl.1} parent=0 // pred_check_branch
    %2111 = sbr.rel (0) target = $region29
  $region28: #{_forward_impl.1} parent=0 // pred_region
    _
  $region29: #{_forward_impl.1} parent=0 // pred_fallthru
    _
  // Predicated region
  $region30: #{_forward_impl.1} parent=0 // pred_check
    _
  $region31: #{_forward_impl.1} parent=0 // pred_check_branch
    %2113 = sbr.rel (0) target = $region33
  $region32: #{_forward_impl.1} parent=0 // pred_region
    _
  $region33: #{_forward_impl.1} parent=0 // pred_fallthru
    _

</llo_original>
